<compile_context>
chip_gen: v6e
topology: v6e:2x2x1
jax: 0.10.0
libtpu: 0.0.40
codegen_flags: <defaults>
</compile_context>

<pallas_src>
import functools

import jax
import jax.numpy as jnp
from jax import lax
from jax.experimental import pallas as pl
from jax.experimental.pallas import tpu as pltpu


def _round_up(n, m):
    return (n + m - 1) // m * m


def _tim_kernel(x_ref, w_ref, b_ref, out_ref, v_scr, prev_scr, *,
                alpha, inv_tau, v_threshold, t_block):
    """One (batch-tile, time-block) grid point.

    x_ref/out_ref : (t_block, TB, C_pad) VMEM blocks for this time chunk.
    w_ref         : (C_pad, C_pad) bf16, BN folded, loop-invariant.
    b_ref         : (1, C_pad) f32, BN-folded bias.
    v_scr         : (TB, C_pad) f32 membrane potential, persists across T.
    prev_scr      : (TB, C_pad) bf16 previous state (matmul LHS), persists.
    """
    tblk = pl.program_id(1)

    @pl.when(tblk == 0)
    def _():
        # Reset recurrent state at the start of every batch tile's T sweep.
        prev_scr[...] = jnp.zeros_like(prev_scr)
        v_scr[...] = jnp.zeros_like(v_scr)

    one_minus_alpha = 1.0 - alpha
    decay = 1.0 - inv_tau

    def step(ts, carry):
        # Conv1d(C, C, 3, padding=1) on a length-1 sequence == matmul with the
        # middle tap (the other taps hit zero padding). BN is already folded.
        conv = jnp.dot(prev_scr[...], w_ref[...],
                       preferred_element_type=jnp.float32) + b_ref[...]
        # LIF charge / fire / hard reset (v_reset = 0), decay_input=True:
        #   v <- v + (conv - v)/tau  ==  v*(1 - 1/tau) + conv*(1/tau)
        v = v_scr[...] * decay + conv * inv_tau
        spike = v >= v_threshold
        v_scr[...] = jnp.where(spike, 0.0, v)
        new_state = one_minus_alpha * x_ref[ts] + jnp.where(spike, alpha, 0.0)
        out_ref[ts] = new_state
        prev_scr[...] = new_state.astype(jnp.bfloat16)
        return carry

    lax.fori_loop(0, t_block, step, 0, unroll=t_block <= 8)


def _vmem_budget_bytes():
    # Per-generation VMEM: v5e/v6e 128 MiB, v7x 64 MiB. Keep ~25% headroom for
    # Mosaic internal scratch / spills.
    try:
        cap = pltpu.get_tpu_info().vmem_capacity_bytes
    except Exception:
        cap = 64 << 20
    return (cap * 3) // 4


def _single_buffered_spec(block_shape, index_map):
    # Loop-invariant operands: single-buffer to halve their VMEM footprint.
    # (Fallback for Pallas versions without BlockSpec.pipeline_mode.)
    try:
        return pl.BlockSpec(block_shape, index_map,
                            pipeline_mode=pl.Buffered(1))
    except TypeError:
        return pl.BlockSpec(block_shape, index_map)


def _choose_tiles(T, B, C, vmem_budget):
    c_pad = _round_up(max(C, 1), 128)
    b8 = _round_up(max(B, 1), 8)

    # Fill the MXU M dimension (<=256). Split into >=2 batch blocks (for the
    # two v7x TensorCores via the "parallel" axis) only when each block keeps
    # >=128 MXU rows, so v5e/v6e are not penalized with half-empty matmuls.
    if b8 >= 512:
        tb = 256
    elif b8 >= 256:
        tb = _round_up(-(-b8 // 2), 8)
    else:
        tb = b8
    b_pad = _round_up(b8, tb)

    # Time-block size: amortize per-grid-step overhead and tiny DMAs, bounded
    # by the VMEM budget (double-buffered x and out chunks + weight + bias +
    # recurrent scratch).
    fixed = 2 * c_pad * c_pad * 2 + 4 * c_pad * 4 + tb * c_pad * (4 + 2)
    per_t = 4 * tb * c_pad * 4          # f32 x + out chunk rows, 2x-buffered
    avail = vmem_budget - fixed
    t_max = avail // per_t if avail >= per_t else 1
    t_max = max(1, min(64, t_max, T))
    n_chunks = -(-T // t_max)
    t_block = -(-T // n_chunks)         # balanced chunks -> minimal T padding
    t_pad = n_chunks * t_block
    return c_pad, tb, b_pad, t_block, t_pad


def temporal_interaction_module(x, conv_w, conv_b, bn_gamma, bn_beta,
                                bn_mean, bn_var, *, alpha=0.6, tau=2.0,
                                v_threshold=1.0, eps=1e-5):
    T, B, C = x.shape

    budget = _vmem_budget_bytes()
    c_pad, tb, b_pad, t_block, t_pad = _choose_tiles(T, B, C, budget)

    # Fold the Conv1d middle tap (prev @ W_mid^T) and eval-mode BatchNorm
    # affine into a single weight + bias.
    # TODO(synk): training-mode BatchNorm (batch statistics over B) is not
    # implemented; eval-mode running-stat normalization is folded instead.
    scale = bn_gamma / jnp.sqrt(bn_var + eps)
    shift = bn_beta - bn_mean * scale
    w_fold = jnp.transpose(conv_w[:, :, 1]) * scale[None, :]     # (C_in, C_out)
    b_fold = conv_b * scale + shift                              # (C,)

    # Pad only when needed. Padded channels get zero weight/bias, so they never
    # spike and contribute nothing to the matmul; padded batch rows / timesteps
    # are discarded at the end.
    x_f = x if x.dtype == jnp.float32 else x.astype(jnp.float32)
    if (t_pad, b_pad, c_pad) != (T, B, C):
        x_f = jnp.pad(x_f, ((0, t_pad - T), (0, b_pad - B), (0, c_pad - C)))
    if c_pad != C:
        w_fold = jnp.pad(w_fold, ((0, c_pad - C), (0, c_pad - C)))
        b_fold = jnp.pad(b_fold, (0, c_pad - C))
    w_p = w_fold.astype(jnp.bfloat16)
    b_p = b_fold.astype(jnp.float32)[None, :]

    kern = functools.partial(_tim_kernel, alpha=float(alpha),
                             inv_tau=1.0 / float(tau),
                             v_threshold=float(v_threshold),
                             t_block=t_block)

    # VMEM need: double-buffered x/out chunks + weight (assume 2x in case
    # single-buffering is unavailable) + bias + recurrent scratch.
    xblk_bytes = t_block * tb * c_pad * 4
    need = (4 * xblk_bytes
            + 2 * c_pad * c_pad * 2
            + 2 * c_pad * 4
            + tb * c_pad * (4 + 2))
    vmem_limit = int(min(max(need * 5 // 4, 4 << 20), budget))

    out_p = pl.pallas_call(
        kern,
        out_shape=jax.ShapeDtypeStruct((t_pad, b_pad, c_pad), jnp.float32),
        grid_spec=pltpu.PrefetchScalarGridSpec(
            num_scalar_prefetch=0,
            grid=(b_pad // tb, t_pad // t_block),
            in_specs=[
                pl.BlockSpec((t_block, tb, c_pad), lambda b, t: (t, b, 0)),
                _single_buffered_spec((c_pad, c_pad), lambda b, t: (0, 0)),
                _single_buffered_spec((1, c_pad), lambda b, t: (0, 0)),
            ],
            out_specs=pl.BlockSpec((t_block, tb, c_pad), lambda b, t: (t, b, 0)),
            scratch_shapes=[pltpu.VMEM((tb, c_pad), jnp.float32),    # membrane v
                            pltpu.VMEM((tb, c_pad), jnp.bfloat16)],  # prev_state
        ),
        compiler_params=pltpu.CompilerParams(
            dimension_semantics=("parallel", "arbitrary"),
            vmem_limit_bytes=vmem_limit),
    )(x_f, w_p, b_p)

    if (t_pad, b_pad, c_pad) != (T, B, C):
        out_p = out_p[:T, :B, :C]
    return out_p


def temporal_interaction_ref(x, conv_w, conv_b, bn_gamma, bn_beta,
                             bn_mean, bn_var, alpha=0.6, tau=2.0,
                             v_threshold=1.0, eps=1e-5):
    """Pure-JAX reference mirroring the PyTorch forward.

    Matmul LHS/weight are bf16 (f32 accumulation) to match the kernel's
    precision choice; everything else is f32, identical to PyTorch up to bf16
    rounding of the tiny per-step matmul.
    """
    T, B, C = x.shape
    scale = bn_gamma / jnp.sqrt(bn_var + eps)
    shift = bn_beta - bn_mean * scale
    w_fold = (jnp.transpose(conv_w[:, :, 1]) * scale[None, :]).astype(jnp.bfloat16)
    b_fold = conv_b * scale + shift
    inv_tau = 1.0 / tau
    decay = 1.0 - inv_tau

    def step(carry, xt):
        prev, v = carry
        conv = jnp.dot(prev, w_fold, preferred_element_type=jnp.float32) + b_fold
        v = v * decay + conv * inv_tau
        spike = v >= v_threshold
        v = jnp.where(spike, 0.0, v)
        new_state = (1.0 - alpha) * xt + jnp.where(spike, alpha, 0.0)
        return (new_state.astype(jnp.bfloat16), v), new_state

    init = (jnp.zeros((B, C), jnp.bfloat16), jnp.zeros((B, C), jnp.float32))
    _, out = lax.scan(step, init, x.astype(jnp.float32))
    return out


if __name__ == "__main__":
    T, B, C = 8, 2, 4
    key = jax.random.PRNGKey(0)
    kx, kw, kb = jax.random.split(key, 3)

    x = jax.random.normal(kx, (T, B, C), dtype=jnp.float32)

    # Deterministic Conv1d init (uniform in +/- 1/sqrt(fan_in), fan_in = C*3).
    bound = 1.0 / (C * 3) ** 0.5
    conv_w = jax.random.uniform(kw, (C, C, 3), jnp.float32, -bound, bound)
    conv_b = jax.random.uniform(kb, (C,), jnp.float32, -bound, bound)
    # BatchNorm1d default init / running stats (eval mode).
    bn_gamma = jnp.ones((C,), jnp.float32)
    bn_beta = jnp.zeros((C,), jnp.float32)
    bn_mean = jnp.zeros((C,), jnp.float32)
    bn_var = jnp.ones((C,), jnp.float32)

    out = temporal_interaction_module(x, conv_w, conv_b, bn_gamma, bn_beta,
                                      bn_mean, bn_var)
    out = jax.block_until_ready(out)

    ref = temporal_interaction_ref(x, conv_w, conv_b, bn_gamma, bn_beta,
                                   bn_mean, bn_var)
    assert out.shape == (T, B, C), out.shape
    assert jnp.allclose(out, ref, atol=1e-5, rtol=1e-5), (out, ref)
    print("KERNEL_OK")
</pallas_src>

<mosaic_0001>
module attributes {stable_mosaic.version = 11 : i64} {
  func.func @_tim_kernel(%arg0: i32, %arg1: i32, %arg2: memref<8x8x128xf32, #tpu.memory_space<vmem>>, %arg3: memref<128x128xbf16, #tpu.memory_space<vmem>>, %arg4: memref<1x128xf32, #tpu.memory_space<vmem>>, %arg5: memref<8x8x128xf32, #tpu.memory_space<vmem>>, %arg6: memref<8x128xf32, #tpu.memory_space<vmem>>, %arg7: memref<8x128xbf16, #tpu.memory_space<vmem>>) attributes {dimension_semantics = [#tpu.dimension_semantics<parallel>, #tpu.dimension_semantics<arbitrary>], iteration_bounds = array<i64: 1, 1>, scalar_prefetch = 0 : i64, scratch_operands = 2 : i64, tpu.core_type = #tpu.core_type<tc>, window_params = [{transform_indices = @transform_0, window_bounds = array<i64: 8, 8, 128>}, {pipeline_mode = #tpu.pipeline_mode<synchronous>, transform_indices = @transform_1, window_bounds = array<i64: 128, 128>}, {pipeline_mode = #tpu.pipeline_mode<synchronous>, transform_indices = @transform_2, window_bounds = array<i64: 1, 128>}, {transform_indices = @transform_3, window_bounds = array<i64: 8, 8, 128>}]} {
    %c0_i32 = arith.constant 0 : i32
    %0 = arith.cmpi eq, %arg1, %c0_i32 : i32
    %1 = arith.extui %0 : i1 to i32
    %c0_i32_0 = arith.constant 0 : i32
    %2 = arith.cmpi ne, %1, %c0_i32_0 : i32
    scf.if %2 {
      %cst_192 = arith.constant 0.000000e+00 : bf16
      %259 = vector.broadcast %cst_192 : bf16 to vector<8x128xbf16>
      %c0_193 = arith.constant 0 : index
      %c0_194 = arith.constant 0 : index
      %260 = vector.load %arg7[%c0_193, %c0_194] : memref<8x128xbf16, #tpu.memory_space<vmem>>, vector<8x128xbf16>
      tpu.vector_store %arg7[%c0_193, %c0_194], %259 {strides = array<i32>} : memref<8x128xbf16, #tpu.memory_space<vmem>>, vector<8x128xbf16>,
      %cst_195 = arith.constant 0.000000e+00 : f32
      %261 = vector.broadcast %cst_195 : f32 to vector<8x128xf32>
      %c0_196 = arith.constant 0 : index
      %c0_197 = arith.constant 0 : index
      %262 = vector.load %arg6[%c0_196, %c0_197] : memref<8x128xf32, #tpu.memory_space<vmem>>, vector<8x128xf32>
      tpu.vector_store %arg6[%c0_196, %c0_197], %261 {strides = array<i32>} : memref<8x128xf32, #tpu.memory_space<vmem>>, vector<8x128xf32>,
    } else {
    }
    %c0_i32_1 = arith.constant 0 : i32
    %c0 = arith.constant 0 : index
    %c0_2 = arith.constant 0 : index
    %3 = vector.load %arg7[%c0, %c0_2] : memref<8x128xbf16, #tpu.memory_space<vmem>>, vector<8x128xbf16>
    %c0_3 = arith.constant 0 : index
    %c0_4 = arith.constant 0 : index
    %4 = vector.load %arg3[%c0_3, %c0_4] : memref<128x128xbf16, #tpu.memory_space<vmem>>, vector<128x128xbf16>
    %cst = arith.constant dense<0.000000e+00> : vector<8x128xf32>
    %5 = tpu.matmul %3, %4, %cst {dimension_numbers = #tpu.dot_dimension_numbers<[1], [0], [0], [1], [0, 0, 1, 1], [], []>} : vector<8x128xbf16>, vector<128x128xbf16>, vector<8x128xf32> -> vector<8x128xf32>
    %c0_5 = arith.constant 0 : index
    %c0_6 = arith.constant 0 : index
    %6 = vector.load %arg4[%c0_5, %c0_6] : memref<1x128xf32, #tpu.memory_space<vmem>>, vector<1x128xf32>
    %7 = vector.broadcast %6 : vector<1x128xf32> to vector<8x128xf32>
    %8 = arith.addf %5, %7 : vector<8x128xf32>
    %c0_7 = arith.constant 0 : index
    %c0_8 = arith.constant 0 : index
    %9 = vector.load %arg6[%c0_7, %c0_8] : memref<8x128xf32, #tpu.memory_space<vmem>>, vector<8x128xf32>
    %cst_9 = arith.constant 5.000000e-01 : f32
    %10 = vector.broadcast %cst_9 : f32 to vector<8x128xf32>
    %11 = arith.mulf %9, %10 : vector<8x128xf32>
    %cst_10 = arith.constant 5.000000e-01 : f32
    %12 = vector.broadcast %cst_10 : f32 to vector<8x128xf32>
    %13 = arith.mulf %8, %12 : vector<8x128xf32>
    %14 = arith.addf %11, %13 : vector<8x128xf32>
    %cst_11 = arith.constant 1.000000e+00 : f32
    %15 = vector.broadcast %cst_11 : f32 to vector<8x128xf32>
    %16 = arith.cmpf oge, %14, %15 : vector<8x128xf32>
    %cst_12 = arith.constant 0.000000e+00 : f32
    %17 = vector.broadcast %cst_12 : f32 to vector<8x128xf32>
    %18 = arith.select %16, %17, %14 : vector<8x128xi1>, vector<8x128xf32>
    %c0_13 = arith.constant 0 : index
    %c0_14 = arith.constant 0 : index
    %19 = vector.load %arg6[%c0_13, %c0_14] : memref<8x128xf32, #tpu.memory_space<vmem>>, vector<8x128xf32>
    tpu.vector_store %arg6[%c0_13, %c0_14], %18 {strides = array<i32>} : memref<8x128xf32, #tpu.memory_space<vmem>>, vector<8x128xf32>,
    %20 = arith.index_cast %c0_i32_1 : i32 to index
    %c0_15 = arith.constant 0 : index
    %c0_16 = arith.constant 0 : index
    %21 = vector.load %arg2[%20, %c0_15, %c0_16] : memref<8x8x128xf32, #tpu.memory_space<vmem>>, vector<1x8x128xf32>
    %22 = vector.shape_cast %21 : vector<1x8x128xf32> to vector<8x128xf32>
    %cst_17 = arith.constant 4.000000e-01 : f32
    %23 = vector.broadcast %cst_17 : f32 to vector<8x128xf32>
    %24 = arith.mulf %23, %22 : vector<8x128xf32>
    %cst_18 = arith.constant 6.000000e-01 : f32
    %cst_19 = arith.constant 0.000000e+00 : f32
    %25 = vector.broadcast %cst_18 : f32 to vector<8x128xf32>
    %26 = vector.broadcast %cst_19 : f32 to vector<8x128xf32>
    %27 = arith.select %16, %25, %26 : vector<8x128xi1>, vector<8x128xf32>
    %28 = arith.addf %24, %27 : vector<8x128xf32>
    %29 = arith.index_cast %c0_i32_1 : i32 to index
    %c0_20 = arith.constant 0 : index
    %c0_21 = arith.constant 0 : index
    %30 = vector.load %arg5[%29, %c0_20, %c0_21] : memref<8x8x128xf32, #tpu.memory_space<vmem>>, vector<1x8x128xf32>
    %31 = vector.shape_cast %30 : vector<1x8x128xf32> to vector<8x128xf32>
    %32 = vector.shape_cast %28 : vector<8x128xf32> to vector<1x8x128xf32>
    tpu.vector_store %arg5[%29, %c0_20, %c0_21], %32 {strides = array<i32>} : memref<8x8x128xf32, #tpu.memory_space<vmem>>, vector<1x8x128xf32>,
    %33 = arith.truncf %28 : vector<8x128xf32> to vector<8x128xbf16>
    %c0_22 = arith.constant 0 : index
    %c0_23 = arith.constant 0 : index
    %34 = vector.load %arg7[%c0_22, %c0_23] : memref<8x128xbf16, #tpu.memory_space<vmem>>, vector<8x128xbf16>
    tpu.vector_store %arg7[%c0_22, %c0_23], %33 {strides = array<i32>} : memref<8x128xbf16, #tpu.memory_space<vmem>>, vector<8x128xbf16>,
    %c1_i32 = arith.constant 1 : i32
    %c0_24 = arith.constant 0 : index
    %c0_25 = arith.constant 0 : index
    %35 = vector.load %arg7[%c0_24, %c0_25] : memref<8x128xbf16, #tpu.memory_space<vmem>>, vector<8x128xbf16>
    %c0_26 = arith.constant 0 : index
    %c0_27 = arith.constant 0 : index
    %36 = vector.load %arg3[%c0_26, %c0_27] : memref<128x128xbf16, #tpu.memory_space<vmem>>, vector<128x128xbf16>
    %cst_28 = arith.constant dense<0.000000e+00> : vector<8x128xf32>
    %37 = tpu.matmul %35, %36, %cst_28 {dimension_numbers = #tpu.dot_dimension_numbers<[1], [0], [0], [1], [0, 0, 1, 1], [], []>} : vector<8x128xbf16>, vector<128x128xbf16>, vector<8x128xf32> -> vector<8x128xf32>
    %c0_29 = arith.constant 0 : index
    %c0_30 = arith.constant 0 : index
    %38 = vector.load %arg4[%c0_29, %c0_30] : memref<1x128xf32, #tpu.memory_space<vmem>>, vector<1x128xf32>
    %39 = vector.broadcast %38 : vector<1x128xf32> to vector<8x128xf32>
    %40 = arith.addf %37, %39 : vector<8x128xf32>
    %c0_31 = arith.constant 0 : index
    %c0_32 = arith.constant 0 : index
    %41 = vector.load %arg6[%c0_31, %c0_32] : memref<8x128xf32, #tpu.memory_space<vmem>>, vector<8x128xf32>
    %cst_33 = arith.constant 5.000000e-01 : f32
    %42 = vector.broadcast %cst_33 : f32 to vector<8x128xf32>
    %43 = arith.mulf %41, %42 : vector<8x128xf32>
    %cst_34 = arith.constant 5.000000e-01 : f32
    %44 = vector.broadcast %cst_34 : f32 to vector<8x128xf32>
    %45 = arith.mulf %40, %44 : vector<8x128xf32>
    %46 = arith.addf %43, %45 : vector<8x128xf32>
    %cst_35 = arith.constant 1.000000e+00 : f32
    %47 = vector.broadcast %cst_35 : f32 to vector<8x128xf32>
    %48 = arith.cmpf oge, %46, %47 : vector<8x128xf32>
    %cst_36 = arith.constant 0.000000e+00 : f32
    %49 = vector.broadcast %cst_36 : f32 to vector<8x128xf32>
    %50 = arith.select %48, %49, %46 : vector<8x128xi1>, vector<8x128xf32>
    %c0_37 = arith.constant 0 : index
    %c0_38 = arith.constant 0 : index
    %51 = vector.load %arg6[%c0_37, %c0_38] : memref<8x128xf32, #tpu.memory_space<vmem>>, vector<8x128xf32>
    tpu.vector_store %arg6[%c0_37, %c0_38], %50 {strides = array<i32>} : memref<8x128xf32, #tpu.memory_space<vmem>>, vector<8x128xf32>,
    %52 = arith.index_cast %c1_i32 : i32 to index
    %c0_39 = arith.constant 0 : index
    %c0_40 = arith.constant 0 : index
    %53 = vector.load %arg2[%52, %c0_39, %c0_40] : memref<8x8x128xf32, #tpu.memory_space<vmem>>, vector<1x8x128xf32>
    %54 = vector.shape_cast %53 : vector<1x8x128xf32> to vector<8x128xf32>
    %cst_41 = arith.constant 4.000000e-01 : f32
    %55 = vector.broadcast %cst_41 : f32 to vector<8x128xf32>
    %56 = arith.mulf %55, %54 : vector<8x128xf32>
    %cst_42 = arith.constant 6.000000e-01 : f32
    %cst_43 = arith.constant 0.000000e+00 : f32
    %57 = vector.broadcast %cst_42 : f32 to vector<8x128xf32>
    %58 = vector.broadcast %cst_43 : f32 to vector<8x128xf32>
    %59 = arith.select %48, %57, %58 : vector<8x128xi1>, vector<8x128xf32>
    %60 = arith.addf %56, %59 : vector<8x128xf32>
    %61 = arith.index_cast %c1_i32 : i32 to index
    %c0_44 = arith.constant 0 : index
    %c0_45 = arith.constant 0 : index
    %62 = vector.load %arg5[%61, %c0_44, %c0_45] : memref<8x8x128xf32, #tpu.memory_space<vmem>>, vector<1x8x128xf32>
    %63 = vector.shape_cast %62 : vector<1x8x128xf32> to vector<8x128xf32>
    %64 = vector.shape_cast %60 : vector<8x128xf32> to vector<1x8x128xf32>
    tpu.vector_store %arg5[%61, %c0_44, %c0_45], %64 {strides = array<i32>} : memref<8x8x128xf32, #tpu.memory_space<vmem>>, vector<1x8x128xf32>,
    %65 = arith.truncf %60 : vector<8x128xf32> to vector<8x128xbf16>
    %c0_46 = arith.constant 0 : index
    %c0_47 = arith.constant 0 : index
    %66 = vector.load %arg7[%c0_46, %c0_47] : memref<8x128xbf16, #tpu.memory_space<vmem>>, vector<8x128xbf16>
    tpu.vector_store %arg7[%c0_46, %c0_47], %65 {strides = array<i32>} : memref<8x128xbf16, #tpu.memory_space<vmem>>, vector<8x128xbf16>,
    %c2_i32 = arith.constant 2 : i32
    %c0_48 = arith.constant 0 : index
    %c0_49 = arith.constant 0 : index
    %67 = vector.load %arg7[%c0_48, %c0_49] : memref<8x128xbf16, #tpu.memory_space<vmem>>, vector<8x128xbf16>
    %c0_50 = arith.constant 0 : index
    %c0_51 = arith.constant 0 : index
    %68 = vector.load %arg3[%c0_50, %c0_51] : memref<128x128xbf16, #tpu.memory_space<vmem>>, vector<128x128xbf16>
    %cst_52 = arith.constant dense<0.000000e+00> : vector<8x128xf32>
    %69 = tpu.matmul %67, %68, %cst_52 {dimension_numbers = #tpu.dot_dimension_numbers<[1], [0], [0], [1], [0, 0, 1, 1], [], []>} : vector<8x128xbf16>, vector<128x128xbf16>, vector<8x128xf32> -> vector<8x128xf32>
    %c0_53 = arith.constant 0 : index
    %c0_54 = arith.constant 0 : index
    %70 = vector.load %arg4[%c0_53, %c0_54] : memref<1x128xf32, #tpu.memory_space<vmem>>, vector<1x128xf32>
    %71 = vector.broadcast %70 : vector<1x128xf32> to vector<8x128xf32>
    %72 = arith.addf %69, %71 : vector<8x128xf32>
    %c0_55 = arith.constant 0 : index
    %c0_56 = arith.constant 0 : index
    %73 = vector.load %arg6[%c0_55, %c0_56] : memref<8x128xf32, #tpu.memory_space<vmem>>, vector<8x128xf32>
    %cst_57 = arith.constant 5.000000e-01 : f32
    %74 = vector.broadcast %cst_57 : f32 to vector<8x128xf32>
    %75 = arith.mulf %73, %74 : vector<8x128xf32>
    %cst_58 = arith.constant 5.000000e-01 : f32
    %76 = vector.broadcast %cst_58 : f32 to vector<8x128xf32>
    %77 = arith.mulf %72, %76 : vector<8x128xf32>
    %78 = arith.addf %75, %77 : vector<8x128xf32>
    %cst_59 = arith.constant 1.000000e+00 : f32
    %79 = vector.broadcast %cst_59 : f32 to vector<8x128xf32>
    %80 = arith.cmpf oge, %78, %79 : vector<8x128xf32>
    %cst_60 = arith.constant 0.000000e+00 : f32
    %81 = vector.broadcast %cst_60 : f32 to vector<8x128xf32>
    %82 = arith.select %80, %81, %78 : vector<8x128xi1>, vector<8x128xf32>
    %c0_61 = arith.constant 0 : index
    %c0_62 = arith.constant 0 : index
    %83 = vector.load %arg6[%c0_61, %c0_62] : memref<8x128xf32, #tpu.memory_space<vmem>>, vector<8x128xf32>
    tpu.vector_store %arg6[%c0_61, %c0_62], %82 {strides = array<i32>} : memref<8x128xf32, #tpu.memory_space<vmem>>, vector<8x128xf32>,
    %84 = arith.index_cast %c2_i32 : i32 to index
    %c0_63 = arith.constant 0 : index
    %c0_64 = arith.constant 0 : index
    %85 = vector.load %arg2[%84, %c0_63, %c0_64] : memref<8x8x128xf32, #tpu.memory_space<vmem>>, vector<1x8x128xf32>
    %86 = vector.shape_cast %85 : vector<1x8x128xf32> to vector<8x128xf32>
    %cst_65 = arith.constant 4.000000e-01 : f32
    %87 = vector.broadcast %cst_65 : f32 to vector<8x128xf32>
    %88 = arith.mulf %87, %86 : vector<8x128xf32>
    %cst_66 = arith.constant 6.000000e-01 : f32
    %cst_67 = arith.constant 0.000000e+00 : f32
    %89 = vector.broadcast %cst_66 : f32 to vector<8x128xf32>
    %90 = vector.broadcast %cst_67 : f32 to vector<8x128xf32>
    %91 = arith.select %80, %89, %90 : vector<8x128xi1>, vector<8x128xf32>
    %92 = arith.addf %88, %91 : vector<8x128xf32>
    %93 = arith.index_cast %c2_i32 : i32 to index
    %c0_68 = arith.constant 0 : index
    %c0_69 = arith.constant 0 : index
    %94 = vector.load %arg5[%93, %c0_68, %c0_69] : memref<8x8x128xf32, #tpu.memory_space<vmem>>, vector<1x8x128xf32>
    %95 = vector.shape_cast %94 : vector<1x8x128xf32> to vector<8x128xf32>
    %96 = vector.shape_cast %92 : vector<8x128xf32> to vector<1x8x128xf32>
    tpu.vector_store %arg5[%93, %c0_68, %c0_69], %96 {strides = array<i32>} : memref<8x8x128xf32, #tpu.memory_space<vmem>>, vector<1x8x128xf32>,
    %97 = arith.truncf %92 : vector<8x128xf32> to vector<8x128xbf16>
    %c0_70 = arith.constant 0 : index
    %c0_71 = arith.constant 0 : index
    %98 = vector.load %arg7[%c0_70, %c0_71] : memref<8x128xbf16, #tpu.memory_space<vmem>>, vector<8x128xbf16>
    tpu.vector_store %arg7[%c0_70, %c0_71], %97 {strides = array<i32>} : memref<8x128xbf16, #tpu.memory_space<vmem>>, vector<8x128xbf16>,
    %c3_i32 = arith.constant 3 : i32
    %c0_72 = arith.constant 0 : index
    %c0_73 = arith.constant 0 : index
    %99 = vector.load %arg7[%c0_72, %c0_73] : memref<8x128xbf16, #tpu.memory_space<vmem>>, vector<8x128xbf16>
    %c0_74 = arith.constant 0 : index
    %c0_75 = arith.constant 0 : index
    %100 = vector.load %arg3[%c0_74, %c0_75] : memref<128x128xbf16, #tpu.memory_space<vmem>>, vector<128x128xbf16>
    %cst_76 = arith.constant dense<0.000000e+00> : vector<8x128xf32>
    %101 = tpu.matmul %99, %100, %cst_76 {dimension_numbers = #tpu.dot_dimension_numbers<[1], [0], [0], [1], [0, 0, 1, 1], [], []>} : vector<8x128xbf16>, vector<128x128xbf16>, vector<8x128xf32> -> vector<8x128xf32>
    %c0_77 = arith.constant 0 : index
    %c0_78 = arith.constant 0 : index
    %102 = vector.load %arg4[%c0_77, %c0_78] : memref<1x128xf32, #tpu.memory_space<vmem>>, vector<1x128xf32>
    %103 = vector.broadcast %102 : vector<1x128xf32> to vector<8x128xf32>
    %104 = arith.addf %101, %103 : vector<8x128xf32>
    %c0_79 = arith.constant 0 : index
    %c0_80 = arith.constant 0 : index
    %105 = vector.load %arg6[%c0_79, %c0_80] : memref<8x128xf32, #tpu.memory_space<vmem>>, vector<8x128xf32>
    %cst_81 = arith.constant 5.000000e-01 : f32
    %106 = vector.broadcast %cst_81 : f32 to vector<8x128xf32>
    %107 = arith.mulf %105, %106 : vector<8x128xf32>
    %cst_82 = arith.constant 5.000000e-01 : f32
    %108 = vector.broadcast %cst_82 : f32 to vector<8x128xf32>
    %109 = arith.mulf %104, %108 : vector<8x128xf32>
    %110 = arith.addf %107, %109 : vector<8x128xf32>
    %cst_83 = arith.constant 1.000000e+00 : f32
    %111 = vector.broadcast %cst_83 : f32 to vector<8x128xf32>
    %112 = arith.cmpf oge, %110, %111 : vector<8x128xf32>
    %cst_84 = arith.constant 0.000000e+00 : f32
    %113 = vector.broadcast %cst_84 : f32 to vector<8x128xf32>
    %114 = arith.select %112, %113, %110 : vector<8x128xi1>, vector<8x128xf32>
    %c0_85 = arith.constant 0 : index
    %c0_86 = arith.constant 0 : index
    %115 = vector.load %arg6[%c0_85, %c0_86] : memref<8x128xf32, #tpu.memory_space<vmem>>, vector<8x128xf32>
    tpu.vector_store %arg6[%c0_85, %c0_86], %114 {strides = array<i32>} : memref<8x128xf32, #tpu.memory_space<vmem>>, vector<8x128xf32>,
    %116 = arith.index_cast %c3_i32 : i32 to index
    %c0_87 = arith.constant 0 : index
    %c0_88 = arith.constant 0 : index
    %117 = vector.load %arg2[%116, %c0_87, %c0_88] : memref<8x8x128xf32, #tpu.memory_space<vmem>>, vector<1x8x128xf32>
    %118 = vector.shape_cast %117 : vector<1x8x128xf32> to vector<8x128xf32>
    %cst_89 = arith.constant 4.000000e-01 : f32
    %119 = vector.broadcast %cst_89 : f32 to vector<8x128xf32>
    %120 = arith.mulf %119, %118 : vector<8x128xf32>
    %cst_90 = arith.constant 6.000000e-01 : f32
    %cst_91 = arith.constant 0.000000e+00 : f32
    %121 = vector.broadcast %cst_90 : f32 to vector<8x128xf32>
    %122 = vector.broadcast %cst_91 : f32 to vector<8x128xf32>
    %123 = arith.select %112, %121, %122 : vector<8x128xi1>, vector<8x128xf32>
    %124 = arith.addf %120, %123 : vector<8x128xf32>
    %125 = arith.index_cast %c3_i32 : i32 to index
    %c0_92 = arith.constant 0 : index
    %c0_93 = arith.constant 0 : index
    %126 = vector.load %arg5[%125, %c0_92, %c0_93] : memref<8x8x128xf32, #tpu.memory_space<vmem>>, vector<1x8x128xf32>
    %127 = vector.shape_cast %126 : vector<1x8x128xf32> to vector<8x128xf32>
    %128 = vector.shape_cast %124 : vector<8x128xf32> to vector<1x8x128xf32>
    tpu.vector_store %arg5[%125, %c0_92, %c0_93], %128 {strides = array<i32>} : memref<8x8x128xf32, #tpu.memory_space<vmem>>, vector<1x8x128xf32>,
    %129 = arith.truncf %124 : vector<8x128xf32> to vector<8x128xbf16>
    %c0_94 = arith.constant 0 : index
    %c0_95 = arith.constant 0 : index
    %130 = vector.load %arg7[%c0_94, %c0_95] : memref<8x128xbf16, #tpu.memory_space<vmem>>, vector<8x128xbf16>
    tpu.vector_store %arg7[%c0_94, %c0_95], %129 {strides = array<i32>} : memref<8x128xbf16, #tpu.memory_space<vmem>>, vector<8x128xbf16>,
    %c4_i32 = arith.constant 4 : i32
    %c0_96 = arith.constant 0 : index
    %c0_97 = arith.constant 0 : index
    %131 = vector.load %arg7[%c0_96, %c0_97] : memref<8x128xbf16, #tpu.memory_space<vmem>>, vector<8x128xbf16>
    %c0_98 = arith.constant 0 : index
    %c0_99 = arith.constant 0 : index
    %132 = vector.load %arg3[%c0_98, %c0_99] : memref<128x128xbf16, #tpu.memory_space<vmem>>, vector<128x128xbf16>
    %cst_100 = arith.constant dense<0.000000e+00> : vector<8x128xf32>
    %133 = tpu.matmul %131, %132, %cst_100 {dimension_numbers = #tpu.dot_dimension_numbers<[1], [0], [0], [1], [0, 0, 1, 1], [], []>} : vector<8x128xbf16>, vector<128x128xbf16>, vector<8x128xf32> -> vector<8x128xf32>
    %c0_101 = arith.constant 0 : index
    %c0_102 = arith.constant 0 : index
    %134 = vector.load %arg4[%c0_101, %c0_102] : memref<1x128xf32, #tpu.memory_space<vmem>>, vector<1x128xf32>
    %135 = vector.broadcast %134 : vector<1x128xf32> to vector<8x128xf32>
    %136 = arith.addf %133, %135 : vector<8x128xf32>
    %c0_103 = arith.constant 0 : index
    %c0_104 = arith.constant 0 : index
    %137 = vector.load %arg6[%c0_103, %c0_104] : memref<8x128xf32, #tpu.memory_space<vmem>>, vector<8x128xf32>
    %cst_105 = arith.constant 5.000000e-01 : f32
    %138 = vector.broadcast %cst_105 : f32 to vector<8x128xf32>
    %139 = arith.mulf %137, %138 : vector<8x128xf32>
    %cst_106 = arith.constant 5.000000e-01 : f32
    %140 = vector.broadcast %cst_106 : f32 to vector<8x128xf32>
    %141 = arith.mulf %136, %140 : vector<8x128xf32>
    %142 = arith.addf %139, %141 : vector<8x128xf32>
    %cst_107 = arith.constant 1.000000e+00 : f32
    %143 = vector.broadcast %cst_107 : f32 to vector<8x128xf32>
    %144 = arith.cmpf oge, %142, %143 : vector<8x128xf32>
    %cst_108 = arith.constant 0.000000e+00 : f32
    %145 = vector.broadcast %cst_108 : f32 to vector<8x128xf32>
    %146 = arith.select %144, %145, %142 : vector<8x128xi1>, vector<8x128xf32>
    %c0_109 = arith.constant 0 : index
    %c0_110 = arith.constant 0 : index
    %147 = vector.load %arg6[%c0_109, %c0_110] : memref<8x128xf32, #tpu.memory_space<vmem>>, vector<8x128xf32>
    tpu.vector_store %arg6[%c0_109, %c0_110], %146 {strides = array<i32>} : memref<8x128xf32, #tpu.memory_space<vmem>>, vector<8x128xf32>,
    %148 = arith.index_cast %c4_i32 : i32 to index
    %c0_111 = arith.constant 0 : index
    %c0_112 = arith.constant 0 : index
    %149 = vector.load %arg2[%148, %c0_111, %c0_112] : memref<8x8x128xf32, #tpu.memory_space<vmem>>, vector<1x8x128xf32>
    %150 = vector.shape_cast %149 : vector<1x8x128xf32> to vector<8x128xf32>
    %cst_113 = arith.constant 4.000000e-01 : f32
    %151 = vector.broadcast %cst_113 : f32 to vector<8x128xf32>
    %152 = arith.mulf %151, %150 : vector<8x128xf32>
    %cst_114 = arith.constant 6.000000e-01 : f32
    %cst_115 = arith.constant 0.000000e+00 : f32
    %153 = vector.broadcast %cst_114 : f32 to vector<8x128xf32>
    %154 = vector.broadcast %cst_115 : f32 to vector<8x128xf32>
    %155 = arith.select %144, %153, %154 : vector<8x128xi1>, vector<8x128xf32>
    %156 = arith.addf %152, %155 : vector<8x128xf32>
    %157 = arith.index_cast %c4_i32 : i32 to index
    %c0_116 = arith.constant 0 : index
    %c0_117 = arith.constant 0 : index
    %158 = vector.load %arg5[%157, %c0_116, %c0_117] : memref<8x8x128xf32, #tpu.memory_space<vmem>>, vector<1x8x128xf32>
    %159 = vector.shape_cast %158 : vector<1x8x128xf32> to vector<8x128xf32>
    %160 = vector.shape_cast %156 : vector<8x128xf32> to vector<1x8x128xf32>
    tpu.vector_store %arg5[%157, %c0_116, %c0_117], %160 {strides = array<i32>} : memref<8x8x128xf32, #tpu.memory_space<vmem>>, vector<1x8x128xf32>,
    %161 = arith.truncf %156 : vector<8x128xf32> to vector<8x128xbf16>
    %c0_118 = arith.constant 0 : index
    %c0_119 = arith.constant 0 : index
    %162 = vector.load %arg7[%c0_118, %c0_119] : memref<8x128xbf16, #tpu.memory_space<vmem>>, vector<8x128xbf16>
    tpu.vector_store %arg7[%c0_118, %c0_119], %161 {strides = array<i32>} : memref<8x128xbf16, #tpu.memory_space<vmem>>, vector<8x128xbf16>,
    %c5_i32 = arith.constant 5 : i32
    %c0_120 = arith.constant 0 : index
    %c0_121 = arith.constant 0 : index
    %163 = vector.load %arg7[%c0_120, %c0_121] : memref<8x128xbf16, #tpu.memory_space<vmem>>, vector<8x128xbf16>
    %c0_122 = arith.constant 0 : index
    %c0_123 = arith.constant 0 : index
    %164 = vector.load %arg3[%c0_122, %c0_123] : memref<128x128xbf16, #tpu.memory_space<vmem>>, vector<128x128xbf16>
    %cst_124 = arith.constant dense<0.000000e+00> : vector<8x128xf32>
    %165 = tpu.matmul %163, %164, %cst_124 {dimension_numbers = #tpu.dot_dimension_numbers<[1], [0], [0], [1], [0, 0, 1, 1], [], []>} : vector<8x128xbf16>, vector<128x128xbf16>, vector<8x128xf32> -> vector<8x128xf32>
    %c0_125 = arith.constant 0 : index
    %c0_126 = arith.constant 0 : index
    %166 = vector.load %arg4[%c0_125, %c0_126] : memref<1x128xf32, #tpu.memory_space<vmem>>, vector<1x128xf32>
    %167 = vector.broadcast %166 : vector<1x128xf32> to vector<8x128xf32>
    %168 = arith.addf %165, %167 : vector<8x128xf32>
    %c0_127 = arith.constant 0 : index
    %c0_128 = arith.constant 0 : index
    %169 = vector.load %arg6[%c0_127, %c0_128] : memref<8x128xf32, #tpu.memory_space<vmem>>, vector<8x128xf32>
    %cst_129 = arith.constant 5.000000e-01 : f32
    %170 = vector.broadcast %cst_129 : f32 to vector<8x128xf32>
    %171 = arith.mulf %169, %170 : vector<8x128xf32>
    %cst_130 = arith.constant 5.000000e-01 : f32
    %172 = vector.broadcast %cst_130 : f32 to vector<8x128xf32>
    %173 = arith.mulf %168, %172 : vector<8x128xf32>
    %174 = arith.addf %171, %173 : vector<8x128xf32>
    %cst_131 = arith.constant 1.000000e+00 : f32
    %175 = vector.broadcast %cst_131 : f32 to vector<8x128xf32>
    %176 = arith.cmpf oge, %174, %175 : vector<8x128xf32>
    %cst_132 = arith.constant 0.000000e+00 : f32
    %177 = vector.broadcast %cst_132 : f32 to vector<8x128xf32>
    %178 = arith.select %176, %177, %174 : vector<8x128xi1>, vector<8x128xf32>
    %c0_133 = arith.constant 0 : index
    %c0_134 = arith.constant 0 : index
    %179 = vector.load %arg6[%c0_133, %c0_134] : memref<8x128xf32, #tpu.memory_space<vmem>>, vector<8x128xf32>
    tpu.vector_store %arg6[%c0_133, %c0_134], %178 {strides = array<i32>} : memref<8x128xf32, #tpu.memory_space<vmem>>, vector<8x128xf32>,
    %180 = arith.index_cast %c5_i32 : i32 to index
    %c0_135 = arith.constant 0 : index
    %c0_136 = arith.constant 0 : index
    %181 = vector.load %arg2[%180, %c0_135, %c0_136] : memref<8x8x128xf32, #tpu.memory_space<vmem>>, vector<1x8x128xf32>
    %182 = vector.shape_cast %181 : vector<1x8x128xf32> to vector<8x128xf32>
    %cst_137 = arith.constant 4.000000e-01 : f32
    %183 = vector.broadcast %cst_137 : f32 to vector<8x128xf32>
    %184 = arith.mulf %183, %182 : vector<8x128xf32>
    %cst_138 = arith.constant 6.000000e-01 : f32
    %cst_139 = arith.constant 0.000000e+00 : f32
    %185 = vector.broadcast %cst_138 : f32 to vector<8x128xf32>
    %186 = vector.broadcast %cst_139 : f32 to vector<8x128xf32>
    %187 = arith.select %176, %185, %186 : vector<8x128xi1>, vector<8x128xf32>
    %188 = arith.addf %184, %187 : vector<8x128xf32>
    %189 = arith.index_cast %c5_i32 : i32 to index
    %c0_140 = arith.constant 0 : index
    %c0_141 = arith.constant 0 : index
    %190 = vector.load %arg5[%189, %c0_140, %c0_141] : memref<8x8x128xf32, #tpu.memory_space<vmem>>, vector<1x8x128xf32>
    %191 = vector.shape_cast %190 : vector<1x8x128xf32> to vector<8x128xf32>
    %192 = vector.shape_cast %188 : vector<8x128xf32> to vector<1x8x128xf32>
    tpu.vector_store %arg5[%189, %c0_140, %c0_141], %192 {strides = array<i32>} : memref<8x8x128xf32, #tpu.memory_space<vmem>>, vector<1x8x128xf32>,
    %193 = arith.truncf %188 : vector<8x128xf32> to vector<8x128xbf16>
    %c0_142 = arith.constant 0 : index
    %c0_143 = arith.constant 0 : index
    %194 = vector.load %arg7[%c0_142, %c0_143] : memref<8x128xbf16, #tpu.memory_space<vmem>>, vector<8x128xbf16>
    tpu.vector_store %arg7[%c0_142, %c0_143], %193 {strides = array<i32>} : memref<8x128xbf16, #tpu.memory_space<vmem>>, vector<8x128xbf16>,
    %c6_i32 = arith.constant 6 : i32
    %c0_144 = arith.constant 0 : index
    %c0_145 = arith.constant 0 : index
    %195 = vector.load %arg7[%c0_144, %c0_145] : memref<8x128xbf16, #tpu.memory_space<vmem>>, vector<8x128xbf16>
    %c0_146 = arith.constant 0 : index
    %c0_147 = arith.constant 0 : index
    %196 = vector.load %arg3[%c0_146, %c0_147] : memref<128x128xbf16, #tpu.memory_space<vmem>>, vector<128x128xbf16>
    %cst_148 = arith.constant dense<0.000000e+00> : vector<8x128xf32>
    %197 = tpu.matmul %195, %196, %cst_148 {dimension_numbers = #tpu.dot_dimension_numbers<[1], [0], [0], [1], [0, 0, 1, 1], [], []>} : vector<8x128xbf16>, vector<128x128xbf16>, vector<8x128xf32> -> vector<8x128xf32>
    %c0_149 = arith.constant 0 : index
    %c0_150 = arith.constant 0 : index
    %198 = vector.load %arg4[%c0_149, %c0_150] : memref<1x128xf32, #tpu.memory_space<vmem>>, vector<1x128xf32>
    %199 = vector.broadcast %198 : vector<1x128xf32> to vector<8x128xf32>
    %200 = arith.addf %197, %199 : vector<8x128xf32>
    %c0_151 = arith.constant 0 : index
    %c0_152 = arith.constant 0 : index
    %201 = vector.load %arg6[%c0_151, %c0_152] : memref<8x128xf32, #tpu.memory_space<vmem>>, vector<8x128xf32>
    %cst_153 = arith.constant 5.000000e-01 : f32
    %202 = vector.broadcast %cst_153 : f32 to vector<8x128xf32>
    %203 = arith.mulf %201, %202 : vector<8x128xf32>
    %cst_154 = arith.constant 5.000000e-01 : f32
    %204 = vector.broadcast %cst_154 : f32 to vector<8x128xf32>
    %205 = arith.mulf %200, %204 : vector<8x128xf32>
    %206 = arith.addf %203, %205 : vector<8x128xf32>
    %cst_155 = arith.constant 1.000000e+00 : f32
    %207 = vector.broadcast %cst_155 : f32 to vector<8x128xf32>
    %208 = arith.cmpf oge, %206, %207 : vector<8x128xf32>
    %cst_156 = arith.constant 0.000000e+00 : f32
    %209 = vector.broadcast %cst_156 : f32 to vector<8x128xf32>
    %210 = arith.select %208, %209, %206 : vector<8x128xi1>, vector<8x128xf32>
    %c0_157 = arith.constant 0 : index
    %c0_158 = arith.constant 0 : index
    %211 = vector.load %arg6[%c0_157, %c0_158] : memref<8x128xf32, #tpu.memory_space<vmem>>, vector<8x128xf32>
    tpu.vector_store %arg6[%c0_157, %c0_158], %210 {strides = array<i32>} : memref<8x128xf32, #tpu.memory_space<vmem>>, vector<8x128xf32>,
    %212 = arith.index_cast %c6_i32 : i32 to index
    %c0_159 = arith.constant 0 : index
    %c0_160 = arith.constant 0 : index
    %213 = vector.load %arg2[%212, %c0_159, %c0_160] : memref<8x8x128xf32, #tpu.memory_space<vmem>>, vector<1x8x128xf32>
    %214 = vector.shape_cast %213 : vector<1x8x128xf32> to vector<8x128xf32>
    %cst_161 = arith.constant 4.000000e-01 : f32
    %215 = vector.broadcast %cst_161 : f32 to vector<8x128xf32>
    %216 = arith.mulf %215, %214 : vector<8x128xf32>
    %cst_162 = arith.constant 6.000000e-01 : f32
    %cst_163 = arith.constant 0.000000e+00 : f32
    %217 = vector.broadcast %cst_162 : f32 to vector<8x128xf32>
    %218 = vector.broadcast %cst_163 : f32 to vector<8x128xf32>
    %219 = arith.select %208, %217, %218 : vector<8x128xi1>, vector<8x128xf32>
    %220 = arith.addf %216, %219 : vector<8x128xf32>
    %221 = arith.index_cast %c6_i32 : i32 to index
    %c0_164 = arith.constant 0 : index
    %c0_165 = arith.constant 0 : index
    %222 = vector.load %arg5[%221, %c0_164, %c0_165] : memref<8x8x128xf32, #tpu.memory_space<vmem>>, vector<1x8x128xf32>
    %223 = vector.shape_cast %222 : vector<1x8x128xf32> to vector<8x128xf32>
    %224 = vector.shape_cast %220 : vector<8x128xf32> to vector<1x8x128xf32>
    tpu.vector_store %arg5[%221, %c0_164, %c0_165], %224 {strides = array<i32>} : memref<8x8x128xf32, #tpu.memory_space<vmem>>, vector<1x8x128xf32>,
    %225 = arith.truncf %220 : vector<8x128xf32> to vector<8x128xbf16>
    %c0_166 = arith.constant 0 : index
    %c0_167 = arith.constant 0 : index
    %226 = vector.load %arg7[%c0_166, %c0_167] : memref<8x128xbf16, #tpu.memory_space<vmem>>, vector<8x128xbf16>
    tpu.vector_store %arg7[%c0_166, %c0_167], %225 {strides = array<i32>} : memref<8x128xbf16, #tpu.memory_space<vmem>>, vector<8x128xbf16>,
    %c7_i32 = arith.constant 7 : i32
    %c0_168 = arith.constant 0 : index
    %c0_169 = arith.constant 0 : index
    %227 = vector.load %arg7[%c0_168, %c0_169] : memref<8x128xbf16, #tpu.memory_space<vmem>>, vector<8x128xbf16>
    %c0_170 = arith.constant 0 : index
    %c0_171 = arith.constant 0 : index
    %228 = vector.load %arg3[%c0_170, %c0_171] : memref<128x128xbf16, #tpu.memory_space<vmem>>, vector<128x128xbf16>
    %cst_172 = arith.constant dense<0.000000e+00> : vector<8x128xf32>
    %229 = tpu.matmul %227, %228, %cst_172 {dimension_numbers = #tpu.dot_dimension_numbers<[1], [0], [0], [1], [0, 0, 1, 1], [], []>} : vector<8x128xbf16>, vector<128x128xbf16>, vector<8x128xf32> -> vector<8x128xf32>
    %c0_173 = arith.constant 0 : index
    %c0_174 = arith.constant 0 : index
    %230 = vector.load %arg4[%c0_173, %c0_174] : memref<1x128xf32, #tpu.memory_space<vmem>>, vector<1x128xf32>
    %231 = vector.broadcast %230 : vector<1x128xf32> to vector<8x128xf32>
    %232 = arith.addf %229, %231 : vector<8x128xf32>
    %c0_175 = arith.constant 0 : index
    %c0_176 = arith.constant 0 : index
    %233 = vector.load %arg6[%c0_175, %c0_176] : memref<8x128xf32, #tpu.memory_space<vmem>>, vector<8x128xf32>
    %cst_177 = arith.constant 5.000000e-01 : f32
    %234 = vector.broadcast %cst_177 : f32 to vector<8x128xf32>
    %235 = arith.mulf %233, %234 : vector<8x128xf32>
    %cst_178 = arith.constant 5.000000e-01 : f32
    %236 = vector.broadcast %cst_178 : f32 to vector<8x128xf32>
    %237 = arith.mulf %232, %236 : vector<8x128xf32>
    %238 = arith.addf %235, %237 : vector<8x128xf32>
    %cst_179 = arith.constant 1.000000e+00 : f32
    %239 = vector.broadcast %cst_179 : f32 to vector<8x128xf32>
    %240 = arith.cmpf oge, %238, %239 : vector<8x128xf32>
    %cst_180 = arith.constant 0.000000e+00 : f32
    %241 = vector.broadcast %cst_180 : f32 to vector<8x128xf32>
    %242 = arith.select %240, %241, %238 : vector<8x128xi1>, vector<8x128xf32>
    %c0_181 = arith.constant 0 : index
    %c0_182 = arith.constant 0 : index
    %243 = vector.load %arg6[%c0_181, %c0_182] : memref<8x128xf32, #tpu.memory_space<vmem>>, vector<8x128xf32>
    tpu.vector_store %arg6[%c0_181, %c0_182], %242 {strides = array<i32>} : memref<8x128xf32, #tpu.memory_space<vmem>>, vector<8x128xf32>,
    %244 = arith.index_cast %c7_i32 : i32 to index
    %c0_183 = arith.constant 0 : index
    %c0_184 = arith.constant 0 : index
    %245 = vector.load %arg2[%244, %c0_183, %c0_184] : memref<8x8x128xf32, #tpu.memory_space<vmem>>, vector<1x8x128xf32>
    %246 = vector.shape_cast %245 : vector<1x8x128xf32> to vector<8x128xf32>
    %cst_185 = arith.constant 4.000000e-01 : f32
    %247 = vector.broadcast %cst_185 : f32 to vector<8x128xf32>
    %248 = arith.mulf %247, %246 : vector<8x128xf32>
    %cst_186 = arith.constant 6.000000e-01 : f32
    %cst_187 = arith.constant 0.000000e+00 : f32
    %249 = vector.broadcast %cst_186 : f32 to vector<8x128xf32>
    %250 = vector.broadcast %cst_187 : f32 to vector<8x128xf32>
    %251 = arith.select %240, %249, %250 : vector<8x128xi1>, vector<8x128xf32>
    %252 = arith.addf %248, %251 : vector<8x128xf32>
    %253 = arith.index_cast %c7_i32 : i32 to index
    %c0_188 = arith.constant 0 : index
    %c0_189 = arith.constant 0 : index
    %254 = vector.load %arg5[%253, %c0_188, %c0_189] : memref<8x8x128xf32, #tpu.memory_space<vmem>>, vector<1x8x128xf32>
    %255 = vector.shape_cast %254 : vector<1x8x128xf32> to vector<8x128xf32>
    %256 = vector.shape_cast %252 : vector<8x128xf32> to vector<1x8x128xf32>
    tpu.vector_store %arg5[%253, %c0_188, %c0_189], %256 {strides = array<i32>} : memref<8x8x128xf32, #tpu.memory_space<vmem>>, vector<1x8x128xf32>,
    %257 = arith.truncf %252 : vector<8x128xf32> to vector<8x128xbf16>
    %c0_190 = arith.constant 0 : index
    %c0_191 = arith.constant 0 : index
    %258 = vector.load %arg7[%c0_190, %c0_191] : memref<8x128xbf16, #tpu.memory_space<vmem>>, vector<8x128xbf16>
    tpu.vector_store %arg7[%c0_190, %c0_191], %257 {strides = array<i32>} : memref<8x128xbf16, #tpu.memory_space<vmem>>, vector<8x128xbf16>,
    %c8_i32 = arith.constant 8 : i32
    return
  }
  func.func @transform_0(%arg0: i32, %arg1: i32) -> (i32, i32, i32) {
    %c0_i32 = arith.constant 0 : i32
    %c0_i32_0 = arith.constant 0 : i32
    return %arg1, %arg0, %c0_i32 : i32, i32, i32
  }
  func.func @transform_1(%arg0: i32, %arg1: i32) -> (i32, i32) {
    %c0_i32 = arith.constant 0 : i32
    %c0_i32_0 = arith.constant 0 : i32
    %c0_i32_1 = arith.constant 0 : i32
    return %c0_i32, %c0_i32_0 : i32, i32
  }
  func.func @transform_2(%arg0: i32, %arg1: i32) -> (i32, i32) {
    %c0_i32 = arith.constant 0 : i32
    %c0_i32_0 = arith.constant 0 : i32
    %c0_i32_1 = arith.constant 0 : i32
    return %c0_i32, %c0_i32_0 : i32, i32
  }
  func.func @transform_3(%arg0: i32, %arg1: i32) -> (i32, i32, i32) {
    %c0_i32 = arith.constant 0 : i32
    %c0_i32_0 = arith.constant 0 : i32
    return %arg1, %arg0, %c0_i32 : i32, i32, i32
  }
}

</mosaic_0001>

<llo_original>
// kernel: tpu_custom_call.1
$region0: #{tpu_custom_call.1}
  #allocation0 [shape = 'u32[]', space=smem, size = 0x4, offset = 0x4, fixed_abs, tag = 'smem constant byte address 0x4 - core index']
  #allocation1 [shape = 'u32[144,128]{1,0:T(1,128)}', space=vmem, size = 0x12000, scoped, tag = 'internal scratch']
  #allocation2 [shape = 'f32[8,128]{1,0:T(8,128)}', space=vmem, size = 0x1000, scoped, tag = 'scratch operand']
  #allocation3 [shape = 'bf16[8,128]{1,0:T(8,128)(2,1)}', space=vmem, size = 0x800, scoped, tag = 'scratch operand']
  %s0 = inlined_call_operand.hbm [shape: f32[8,8,128], index: 0, kind: input, shape index: {}]
  %s1 = inlined_call_operand.hbm [shape: bf16[128,128], index: 1, kind: input, shape index: {}]
  %s2 = inlined_call_operand.vmem [shape: f32[1,128], index: 2, kind: input, shape index: {}]
  %s3 = inlined_call_operand.hbm [shape: f32[8,8,128], index: 3, kind: output, shape index: {}]
  %s4 = sld [smem:[#allocation0]]
  $region34: #{tpu_custom_call.1} parent=0
    _
  %s6 = ssub.s32 1, %s4
  %s7 = scalar_select 0, %s6, %s4
  $region1: #{tpu_custom_call.1} parent=0
    #allocation4 [shape = 'u8[32768]{0}', space=vmem, size = 0x8000, scoped, tag = 'input window, operand 0, single buffered']
    #allocation5 [shape = 's32[1]{0}', space=sflag, size = 0x4, scoped, tag = 'scoped memory for tpu_custom_call.1']
    #allocation6 [shape = 's32[1]{0}', space=sflag, size = 0x4, scoped, tag = 'scoped memory for tpu_custom_call.1']
    #allocation7 [shape = 'u8[32768]{0}', space=vmem, size = 0x8000, scoped, tag = 'input window, operand 1, single buffered']
    #allocation8 [shape = 's32[1]{0}', space=sflag, size = 0x4, scoped, tag = 'scoped memory for tpu_custom_call.1']
    #allocation9 [shape = 'u8[32768]{0}', space=vmem, size = 0x8000, scoped, tag = 'output window, operand 0, single buffered']
    %8 = vsyncpa [#allocation5], 0
    %9 = vsyncpa [#allocation8], 0
    %10 = vsyncpa [#allocation6], 0
    // Predicated region
    $region2: #{tpu_custom_call.1} parent=1 // pred_check
      _
    $region3: #{tpu_custom_call.1} parent=1 // pred_check_branch
      %12 = sbr.rel (0) target = $region5
    $region4: #{tpu_custom_call.1} parent=1 // pred_region
      %s14 = ssub.s32 1024, 1024
      %15 = vsyncadd [#allocation5], %s14
      %s16 = sshll.u32 [#allocation4], 4
      %s17 = int_to_ptr.vmem [resolvable:$true] %s16
      %22 = dma.hbm_to_vmem [thread:$0]  %s0, 1024, %s17, [#allocation5], 128, 128, 8
    $region5: #{tpu_custom_call.1} parent=1 // pred_fallthru
      _
    // Predicated region
    $region6: #{tpu_custom_call.1} parent=1 // pred_check
      _
    $region7: #{tpu_custom_call.1} parent=1 // pred_check_branch
      %24 = sbr.rel (0) target = $region9
    $region8: #{tpu_custom_call.1} parent=1 // pred_region
      %s26 = ssub.s32 1024, 1024
      %27 = vsyncadd [#allocation8], %s26
      %s28 = sshll.u32 [#allocation7], 4
      %s29 = int_to_ptr.vmem [resolvable:$true] %s28
      %34 = dma.hbm_to_vmem [thread:$0]  %s1, 1024, %s29, [#allocation8], 64, 64, 4
    $region9: #{tpu_custom_call.1} parent=1 // pred_fallthru
      _
    // Predicated region
    $region10: #{tpu_custom_call.1} parent=1 // pred_check
      _
    $region11: #{tpu_custom_call.1} parent=1 // pred_check_branch
      %36 = sbr.rel (0) target = $region13
    $region12: #{tpu_custom_call.1} parent=1 // pred_region
      _
    $region13: #{tpu_custom_call.1} parent=1 // pred_fallthru
      _
    // Predicated region
    $region14: #{tpu_custom_call.1} parent=1 // pred_check
      _
    $region15: #{tpu_custom_call.1} parent=1 // pred_check_branch
      %38 = sbr.rel (0) target = $region17
    $region16: #{tpu_custom_call.1} parent=1 // pred_region
      %39 = dma.done [#allocation5], 1024
    $region17: #{tpu_custom_call.1} parent=1 // pred_fallthru
      _
    // Predicated region
    $region18: #{tpu_custom_call.1} parent=1 // pred_check
      _
    $region19: #{tpu_custom_call.1} parent=1 // pred_check_branch
      %41 = sbr.rel (0) target = $region21
    $region20: #{tpu_custom_call.1} parent=1 // pred_region
      %42 = dma.done [#allocation8], 1024
    $region21: #{tpu_custom_call.1} parent=1 // pred_fallthru
      _
    %p44 = scmp.eq.s32.totalorder 0, 0
    // Predicated region
    $region22: #{tpu_custom_call.1} parent=1 // pred_check
      %p45 = pneg %p44
    $region23: #{tpu_custom_call.1} parent=1 // pred_check_branch
      %47 = sbr.rel (%p45) target = $region25
    $region24: #{tpu_custom_call.1} parent=1 // pred_region
      %48 = vst [vmem:[#allocation3] sm:$0xf] 0
      %49 = vst [vmem:[#allocation2] sm:$0xff] 0.0
    $region25: #{tpu_custom_call.1} parent=1 // pred_fallthru
      _
    %v50 = vld [vmem:[#allocation3] sm:$0xf]
    %v51 = vld [vmem:[#allocation7] sm:$0xf]
    %v52 = vld [vmem:[#allocation7 + $0x4] sm:$0xf]
    %v53 = vld [vmem:[#allocation7 + $0x8] sm:$0xf]
    %v54 = vld [vmem:[#allocation7 + $0xc] sm:$0xf]
    %v55 = vld [vmem:[#allocation7 + $0x10] sm:$0xf]
    %v56 = vld [vmem:[#allocation7 + $0x14] sm:$0xf]
    %v57 = vld [vmem:[#allocation7 + $0x18] sm:$0xf]
    %v58 = vld [vmem:[#allocation7 + $0x1c] sm:$0xf]
    %v59 = vld [vmem:[#allocation7 + $0x20] sm:$0xf]
    %v60 = vld [vmem:[#allocation7 + $0x24] sm:$0xf]
    %v61 = vld [vmem:[#allocation7 + $0x28] sm:$0xf]
    %v62 = vld [vmem:[#allocation7 + $0x2c] sm:$0xf]
    %v63 = vld [vmem:[#allocation7 + $0x30] sm:$0xf]
    %v64 = vld [vmem:[#allocation7 + $0x34] sm:$0xf]
    %v65 = vld [vmem:[#allocation7 + $0x38] sm:$0xf]
    %v66 = vld [vmem:[#allocation7 + $0x3c] sm:$0xf]
    %v67 = vld [vmem:[%s2] sm:$0x1]
    %v69 = vlaneseq
    %v70 = vshrl.u32 %v69, 7
    %v71 = vsub.s32 0, %v70
    %v72 = vrot.slane %v67, %v71
    %v90 = vunpack.c.l.b16 %v51
    %v91 = vunpack.c.l.b16 %v52
    %v92 = vunpack.c.l.b16 %v53
    %v93 = vunpack.c.l.b16 %v54
    %v94 = vunpack.c.l.b16 %v55
    %v95 = vunpack.c.l.b16 %v56
    %v96 = vunpack.c.l.b16 %v57
    %v97 = vunpack.c.l.b16 %v58
    %v98 = vunpack.c.l.b16 %v59
    %v99 = vunpack.c.l.b16 %v60
    %v100 = vunpack.c.l.b16 %v61
    %v101 = vunpack.c.l.b16 %v62
    %v102 = vunpack.c.l.b16 %v63
    %v103 = vunpack.c.l.b16 %v64
    %v104 = vunpack.c.l.b16 %v65
    %v105 = vunpack.c.l.b16 %v66
    %v106 = vpack.c.b16 %v91, %v90
    %v107 = vpack.c.b16 %v93, %v92
    %v108 = vpack.c.b16 %v95, %v94
    %v109 = vpack.c.b16 %v97, %v96
    %v110 = vpack.c.b16 %v99, %v98
    %v111 = vpack.c.b16 %v101, %v100
    %v112 = vpack.c.b16 %v103, %v102
    %v113 = vpack.c.b16 %v105, %v104
    %122 = vmatprep.subr.bf16.mxu0 0
    %123 = vmatpush1.bf16.msra.mxu0 %v113
    %124 = vmatprep.subr.bf16.mxu0 0
    %125 = vmatpush1.bf16.msra.mxu0 %v112
    %126 = vmatprep.subr.bf16.mxu0 0
    %127 = vmatpush1.bf16.msra.mxu0 %v111
    %128 = vmatprep.subr.bf16.mxu0 0
    %129 = vmatpush1.bf16.msra.mxu0 %v110
    %130 = vmatprep.subr.bf16.mxu0 0
    %131 = vmatpush1.bf16.msra.mxu0 %v109
    %132 = vmatprep.subr.bf16.mxu0 0
    %133 = vmatpush1.bf16.msra.mxu0 %v108
    %134 = vmatprep.subr.bf16.mxu0 0
    %135 = vmatpush1.bf16.msra.mxu0 %v107
    %136 = vmatprep.subr.bf16.mxu0 0
    %137 = vmatpush1.bf16.msra.mxu0 %v106
    %138 = vmatprep.subr.bf16.mxu0 0
    %139 = vmatpush2.bf16.msra.mxu0 0
    %140 = vmatprep.subr.bf16.mxu0 0
    %141 = vmatpush2.bf16.msra.mxu0 0
    %142 = vmatprep.subr.bf16.mxu0 0
    %143 = vmatpush2.bf16.msra.mxu0 0
    %144 = vmatprep.subr.bf16.mxu0 0
    %145 = vmatpush2.bf16.msra.mxu0 0
    %146 = vmatprep.subr.bf16.mxu0 0
    %147 = vmatpush2.bf16.msra.mxu0 0
    %148 = vmatprep.subr.bf16.mxu0 0
    %149 = vmatpush2.bf16.msra.mxu0 0
    %150 = vmatprep.subr.bf16.mxu0 0
    %151 = vmatpush2.bf16.msra.mxu0 0
    %152 = vmatprep.subr.bf16.mxu0 0
    %153 = vmatpush2.bf16.msra.mxu0 0
    %154 = vmatprep.mubr.bf16.mxu0 0
    %155 = vmatmul.mubr.bf16.gmra.mxu0 %v50
    %v156 = vpop.f32.mrf.mxu0
    %v157 = vadd.f32 %v72, %v156
    %v158 = vpop.f32.mrf.mxu0
    %v159 = vpop.f32.mrf.mxu0
    %v160 = vpop.f32.mrf.mxu0
    %161 = vdwg.mxu0
    %v162 = vld [vmem:[#allocation2] sm:$0xff]
    %v163 = vmul.f32 %v162, 0.5
    %v164 = vmul.f32 %v157, 0.5
    %v165 = vadd.f32 %v163, %v164
    %vm166 = vcmp.ge.f32.partialorder %v165, 1.0
    %v167 = vsel %vm166, 0.0, %v165
    %168 = vst [vmem:[#allocation2] sm:$0xff] %v167
    %v169 = vld [vmem:[#allocation4] sm:$0xff]
    %v170 = vmul.f32 %v169, 0.4
    %v171 = vsel %vm166, 0.6, 0.0
    %v172 = vadd.f32 %v170, %v171
    %173 = vst [vmem:[#allocation9] sm:$0xff] %v172
    %v174 = vpack.c.bf16 %v172, %v172
    %175 = vst [vmem:[#allocation3] sm:$0xf] %v174
    %v176 = vld [vmem:[#allocation3] sm:$0xf]
    %v177 = vld [vmem:[#allocation7] sm:$0xf]
    %v178 = vld [vmem:[#allocation7 + $0x4] sm:$0xf]
    %v179 = vld [vmem:[#allocation7 + $0x8] sm:$0xf]
    %v180 = vld [vmem:[#allocation7 + $0xc] sm:$0xf]
    %v181 = vld [vmem:[#allocation7 + $0x10] sm:$0xf]
    %v182 = vld [vmem:[#allocation7 + $0x14] sm:$0xf]
    %v183 = vld [vmem:[#allocation7 + $0x18] sm:$0xf]
    %v184 = vld [vmem:[#allocation7 + $0x1c] sm:$0xf]
    %v185 = vld [vmem:[#allocation7 + $0x20] sm:$0xf]
    %v186 = vld [vmem:[#allocation7 + $0x24] sm:$0xf]
    %v187 = vld [vmem:[#allocation7 + $0x28] sm:$0xf]
    %v188 = vld [vmem:[#allocation7 + $0x2c] sm:$0xf]
    %v189 = vld [vmem:[#allocation7 + $0x30] sm:$0xf]
    %v190 = vld [vmem:[#allocation7 + $0x34] sm:$0xf]
    %v191 = vld [vmem:[#allocation7 + $0x38] sm:$0xf]
    %v192 = vld [vmem:[#allocation7 + $0x3c] sm:$0xf]
    %v193 = vld [vmem:[%s2] sm:$0x1]
    %v195 = vlaneseq
    %v196 = vshrl.u32 %v195, 7
    %v197 = vsub.s32 0, %v196
    %v198 = vrot.slane %v193, %v197
    %v216 = vunpack.c.l.b16 %v177
    %v217 = vunpack.c.l.b16 %v178
    %v218 = vunpack.c.l.b16 %v179
    %v219 = vunpack.c.l.b16 %v180
    %v220 = vunpack.c.l.b16 %v181
    %v221 = vunpack.c.l.b16 %v182
    %v222 = vunpack.c.l.b16 %v183
    %v223 = vunpack.c.l.b16 %v184
    %v224 = vunpack.c.l.b16 %v185
    %v225 = vunpack.c.l.b16 %v186
    %v226 = vunpack.c.l.b16 %v187
    %v227 = vunpack.c.l.b16 %v188
    %v228 = vunpack.c.l.b16 %v189
    %v229 = vunpack.c.l.b16 %v190
    %v230 = vunpack.c.l.b16 %v191
    %v231 = vunpack.c.l.b16 %v192
    %v232 = vpack.c.b16 %v217, %v216
    %v233 = vpack.c.b16 %v219, %v218
    %v234 = vpack.c.b16 %v221, %v220
    %v235 = vpack.c.b16 %v223, %v222
    %v236 = vpack.c.b16 %v225, %v224
    %v237 = vpack.c.b16 %v227, %v226
    %v238 = vpack.c.b16 %v229, %v228
    %v239 = vpack.c.b16 %v231, %v230
    %248 = vmatprep.subr.bf16.mxu0 0
    %249 = vmatpush1.bf16.msra.mxu0 %v239
    %250 = vmatprep.subr.bf16.mxu0 0
    %251 = vmatpush1.bf16.msra.mxu0 %v238
    %252 = vmatprep.subr.bf16.mxu0 0
    %253 = vmatpush1.bf16.msra.mxu0 %v237
    %254 = vmatprep.subr.bf16.mxu0 0
    %255 = vmatpush1.bf16.msra.mxu0 %v236
    %256 = vmatprep.subr.bf16.mxu0 0
    %257 = vmatpush1.bf16.msra.mxu0 %v235
    %258 = vmatprep.subr.bf16.mxu0 0
    %259 = vmatpush1.bf16.msra.mxu0 %v234
    %260 = vmatprep.subr.bf16.mxu0 0
    %261 = vmatpush1.bf16.msra.mxu0 %v233
    %262 = vmatprep.subr.bf16.mxu0 0
    %263 = vmatpush1.bf16.msra.mxu0 %v232
    %264 = vmatprep.subr.bf16.mxu0 0
    %265 = vmatpush2.bf16.msra.mxu0 0
    %266 = vmatprep.subr.bf16.mxu0 0
    %267 = vmatpush2.bf16.msra.mxu0 0
    %268 = vmatprep.subr.bf16.mxu0 0
    %269 = vmatpush2.bf16.msra.mxu0 0
    %270 = vmatprep.subr.bf16.mxu0 0
    %271 = vmatpush2.bf16.msra.mxu0 0
    %272 = vmatprep.subr.bf16.mxu0 0
    %273 = vmatpush2.bf16.msra.mxu0 0
    %274 = vmatprep.subr.bf16.mxu0 0
    %275 = vmatpush2.bf16.msra.mxu0 0
    %276 = vmatprep.subr.bf16.mxu0 0
    %277 = vmatpush2.bf16.msra.mxu0 0
    %278 = vmatprep.subr.bf16.mxu0 0
    %279 = vmatpush2.bf16.msra.mxu0 0
    %280 = vmatprep.mubr.bf16.mxu0 0
    %281 = vmatmul.mubr.bf16.gmra.mxu0 %v176
    %v282 = vpop.f32.mrf.mxu0
    %v283 = vadd.f32 %v198, %v282
    %v284 = vpop.f32.mrf.mxu0
    %v285 = vpop.f32.mrf.mxu0
    %v286 = vpop.f32.mrf.mxu0
    %287 = vdwg.mxu0
    %v288 = vld [vmem:[#allocation2] sm:$0xff]
    %v289 = vmul.f32 %v288, 0.5
    %v290 = vmul.f32 %v283, 0.5
    %v291 = vadd.f32 %v289, %v290
    %vm292 = vcmp.ge.f32.partialorder %v291, 1.0
    %v293 = vsel %vm292, 0.0, %v291
    %294 = vst [vmem:[#allocation2] sm:$0xff] %v293
    %s295 = scalar_lea.vmem [#allocation4], 8
    %v296 = vld [vmem:[%s295] sm:$0xff]
    %v297 = vmul.f32 %v296, 0.4
    %v298 = vsel %vm292, 0.6, 0.0
    %v299 = vadd.f32 %v297, %v298
    %s300 = scalar_lea.vmem [#allocation9], 8
    %301 = vst [vmem:[%s300] sm:$0xff] %v299
    %v302 = vpack.c.bf16 %v299, %v299
    %303 = vst [vmem:[#allocation3] sm:$0xf] %v302
    %v304 = vld [vmem:[#allocation3] sm:$0xf]
    %v305 = vld [vmem:[#allocation7] sm:$0xf]
    %v306 = vld [vmem:[#allocation7 + $0x4] sm:$0xf]
    %v307 = vld [vmem:[#allocation7 + $0x8] sm:$0xf]
    %v308 = vld [vmem:[#allocation7 + $0xc] sm:$0xf]
    %v309 = vld [vmem:[#allocation7 + $0x10] sm:$0xf]
    %v310 = vld [vmem:[#allocation7 + $0x14] sm:$0xf]
    %v311 = vld [vmem:[#allocation7 + $0x18] sm:$0xf]
    %v312 = vld [vmem:[#allocation7 + $0x1c] sm:$0xf]
    %v313 = vld [vmem:[#allocation7 + $0x20] sm:$0xf]
    %v314 = vld [vmem:[#allocation7 + $0x24] sm:$0xf]
    %v315 = vld [vmem:[#allocation7 + $0x28] sm:$0xf]
    %v316 = vld [vmem:[#allocation7 + $0x2c] sm:$0xf]
    %v317 = vld [vmem:[#allocation7 + $0x30] sm:$0xf]
    %v318 = vld [vmem:[#allocation7 + $0x34] sm:$0xf]
    %v319 = vld [vmem:[#allocation7 + $0x38] sm:$0xf]
    %v320 = vld [vmem:[#allocation7 + $0x3c] sm:$0xf]
    %v321 = vld [vmem:[%s2] sm:$0x1]
    %v323 = vlaneseq
    %v324 = vshrl.u32 %v323, 7
    %v325 = vsub.s32 0, %v324
    %v326 = vrot.slane %v321, %v325
    %v344 = vunpack.c.l.b16 %v305
    %v345 = vunpack.c.l.b16 %v306
    %v346 = vunpack.c.l.b16 %v307
    %v347 = vunpack.c.l.b16 %v308
    %v348 = vunpack.c.l.b16 %v309
    %v349 = vunpack.c.l.b16 %v310
    %v350 = vunpack.c.l.b16 %v311
    %v351 = vunpack.c.l.b16 %v312
    %v352 = vunpack.c.l.b16 %v313
    %v353 = vunpack.c.l.b16 %v314
    %v354 = vunpack.c.l.b16 %v315
    %v355 = vunpack.c.l.b16 %v316
    %v356 = vunpack.c.l.b16 %v317
    %v357 = vunpack.c.l.b16 %v318
    %v358 = vunpack.c.l.b16 %v319
    %v359 = vunpack.c.l.b16 %v320
    %v360 = vpack.c.b16 %v345, %v344
    %v361 = vpack.c.b16 %v347, %v346
    %v362 = vpack.c.b16 %v349, %v348
    %v363 = vpack.c.b16 %v351, %v350
    %v364 = vpack.c.b16 %v353, %v352
    %v365 = vpack.c.b16 %v355, %v354
    %v366 = vpack.c.b16 %v357, %v356
    %v367 = vpack.c.b16 %v359, %v358
    %376 = vmatprep.subr.bf16.mxu0 0
    %377 = vmatpush1.bf16.msra.mxu0 %v367
    %378 = vmatprep.subr.bf16.mxu0 0
    %379 = vmatpush1.bf16.msra.mxu0 %v366
    %380 = vmatprep.subr.bf16.mxu0 0
    %381 = vmatpush1.bf16.msra.mxu0 %v365
    %382 = vmatprep.subr.bf16.mxu0 0
    %383 = vmatpush1.bf16.msra.mxu0 %v364
    %384 = vmatprep.subr.bf16.mxu0 0
    %385 = vmatpush1.bf16.msra.mxu0 %v363
    %386 = vmatprep.subr.bf16.mxu0 0
    %387 = vmatpush1.bf16.msra.mxu0 %v362
    %388 = vmatprep.subr.bf16.mxu0 0
    %389 = vmatpush1.bf16.msra.mxu0 %v361
    %390 = vmatprep.subr.bf16.mxu0 0
    %391 = vmatpush1.bf16.msra.mxu0 %v360
    %392 = vmatprep.subr.bf16.mxu0 0
    %393 = vmatpush2.bf16.msra.mxu0 0
    %394 = vmatprep.subr.bf16.mxu0 0
    %395 = vmatpush2.bf16.msra.mxu0 0
    %396 = vmatprep.subr.bf16.mxu0 0
    %397 = vmatpush2.bf16.msra.mxu0 0
    %398 = vmatprep.subr.bf16.mxu0 0
    %399 = vmatpush2.bf16.msra.mxu0 0
    %400 = vmatprep.subr.bf16.mxu0 0
    %401 = vmatpush2.bf16.msra.mxu0 0
    %402 = vmatprep.subr.bf16.mxu0 0
    %403 = vmatpush2.bf16.msra.mxu0 0
    %404 = vmatprep.subr.bf16.mxu0 0
    %405 = vmatpush2.bf16.msra.mxu0 0
    %406 = vmatprep.subr.bf16.mxu0 0
    %407 = vmatpush2.bf16.msra.mxu0 0
    %408 = vmatprep.mubr.bf16.mxu0 0
    %409 = vmatmul.mubr.bf16.gmra.mxu0 %v304
    %v410 = vpop.f32.mrf.mxu0
    %v411 = vadd.f32 %v326, %v410
    %v412 = vpop.f32.mrf.mxu0
    %v413 = vpop.f32.mrf.mxu0
    %v414 = vpop.f32.mrf.mxu0
    %415 = vdwg.mxu0
    %v416 = vld [vmem:[#allocation2] sm:$0xff]
    %v417 = vmul.f32 %v416, 0.5
    %v418 = vmul.f32 %v411, 0.5
    %v419 = vadd.f32 %v417, %v418
    %vm420 = vcmp.ge.f32.partialorder %v419, 1.0
    %v421 = vsel %vm420, 0.0, %v419
    %422 = vst [vmem:[#allocation2] sm:$0xff] %v421
    %s423 = scalar_lea.vmem [#allocation4], 16
    %v424 = vld [vmem:[%s423] sm:$0xff]
    %v425 = vmul.f32 %v424, 0.4
    %v426 = vsel %vm420, 0.6, 0.0
    %v427 = vadd.f32 %v425, %v426
    %s428 = scalar_lea.vmem [#allocation9], 16
    %429 = vst [vmem:[%s428] sm:$0xff] %v427
    %v430 = vpack.c.bf16 %v427, %v427
    %431 = vst [vmem:[#allocation3] sm:$0xf] %v430
    %v432 = vld [vmem:[#allocation3] sm:$0xf]
    %v433 = vld [vmem:[#allocation7] sm:$0xf]
    %v434 = vld [vmem:[#allocation7 + $0x4] sm:$0xf]
    %v435 = vld [vmem:[#allocation7 + $0x8] sm:$0xf]
    %v436 = vld [vmem:[#allocation7 + $0xc] sm:$0xf]
    %v437 = vld [vmem:[#allocation7 + $0x10] sm:$0xf]
    %v438 = vld [vmem:[#allocation7 + $0x14] sm:$0xf]
    %v439 = vld [vmem:[#allocation7 + $0x18] sm:$0xf]
    %v440 = vld [vmem:[#allocation7 + $0x1c] sm:$0xf]
    %v441 = vld [vmem:[#allocation7 + $0x20] sm:$0xf]
    %v442 = vld [vmem:[#allocation7 + $0x24] sm:$0xf]
    %v443 = vld [vmem:[#allocation7 + $0x28] sm:$0xf]
    %v444 = vld [vmem:[#allocation7 + $0x2c] sm:$0xf]
    %v445 = vld [vmem:[#allocation7 + $0x30] sm:$0xf]
    %v446 = vld [vmem:[#allocation7 + $0x34] sm:$0xf]
    %v447 = vld [vmem:[#allocation7 + $0x38] sm:$0xf]
    %v448 = vld [vmem:[#allocation7 + $0x3c] sm:$0xf]
    %v449 = vld [vmem:[%s2] sm:$0x1]
    %v451 = vlaneseq
    %v452 = vshrl.u32 %v451, 7
    %v453 = vsub.s32 0, %v452
    %v454 = vrot.slane %v449, %v453
    %v472 = vunpack.c.l.b16 %v433
    %v473 = vunpack.c.l.b16 %v434
    %v474 = vunpack.c.l.b16 %v435
    %v475 = vunpack.c.l.b16 %v436
    %v476 = vunpack.c.l.b16 %v437
    %v477 = vunpack.c.l.b16 %v438
    %v478 = vunpack.c.l.b16 %v439
    %v479 = vunpack.c.l.b16 %v440
    %v480 = vunpack.c.l.b16 %v441
    %v481 = vunpack.c.l.b16 %v442
    %v482 = vunpack.c.l.b16 %v443
    %v483 = vunpack.c.l.b16 %v444
    %v484 = vunpack.c.l.b16 %v445
    %v485 = vunpack.c.l.b16 %v446
    %v486 = vunpack.c.l.b16 %v447
    %v487 = vunpack.c.l.b16 %v448
    %v488 = vpack.c.b16 %v473, %v472
    %v489 = vpack.c.b16 %v475, %v474
    %v490 = vpack.c.b16 %v477, %v476
    %v491 = vpack.c.b16 %v479, %v478
    %v492 = vpack.c.b16 %v481, %v480
    %v493 = vpack.c.b16 %v483, %v482
    %v494 = vpack.c.b16 %v485, %v484
    %v495 = vpack.c.b16 %v487, %v486
    %504 = vmatprep.subr.bf16.mxu0 0
    %505 = vmatpush1.bf16.msra.mxu0 %v495
    %506 = vmatprep.subr.bf16.mxu0 0
    %507 = vmatpush1.bf16.msra.mxu0 %v494
    %508 = vmatprep.subr.bf16.mxu0 0
    %509 = vmatpush1.bf16.msra.mxu0 %v493
    %510 = vmatprep.subr.bf16.mxu0 0
    %511 = vmatpush1.bf16.msra.mxu0 %v492
    %512 = vmatprep.subr.bf16.mxu0 0
    %513 = vmatpush1.bf16.msra.mxu0 %v491
    %514 = vmatprep.subr.bf16.mxu0 0
    %515 = vmatpush1.bf16.msra.mxu0 %v490
    %516 = vmatprep.subr.bf16.mxu0 0
    %517 = vmatpush1.bf16.msra.mxu0 %v489
    %518 = vmatprep.subr.bf16.mxu0 0
    %519 = vmatpush1.bf16.msra.mxu0 %v488
    %520 = vmatprep.subr.bf16.mxu0 0
    %521 = vmatpush2.bf16.msra.mxu0 0
    %522 = vmatprep.subr.bf16.mxu0 0
    %523 = vmatpush2.bf16.msra.mxu0 0
    %524 = vmatprep.subr.bf16.mxu0 0
    %525 = vmatpush2.bf16.msra.mxu0 0
    %526 = vmatprep.subr.bf16.mxu0 0
    %527 = vmatpush2.bf16.msra.mxu0 0
    %528 = vmatprep.subr.bf16.mxu0 0
    %529 = vmatpush2.bf16.msra.mxu0 0
    %530 = vmatprep.subr.bf16.mxu0 0
    %531 = vmatpush2.bf16.msra.mxu0 0
    %532 = vmatprep.subr.bf16.mxu0 0
    %533 = vmatpush2.bf16.msra.mxu0 0
    %534 = vmatprep.subr.bf16.mxu0 0
    %535 = vmatpush2.bf16.msra.mxu0 0
    %536 = vmatprep.mubr.bf16.mxu0 0
    %537 = vmatmul.mubr.bf16.gmra.mxu0 %v432
    %v538 = vpop.f32.mrf.mxu0
    %v539 = vadd.f32 %v454, %v538
    %v540 = vpop.f32.mrf.mxu0
    %v541 = vpop.f32.mrf.mxu0
    %v542 = vpop.f32.mrf.mxu0
    %543 = vdwg.mxu0
    %v544 = vld [vmem:[#allocation2] sm:$0xff]
    %v545 = vmul.f32 %v544, 0.5
    %v546 = vmul.f32 %v539, 0.5
    %v547 = vadd.f32 %v545, %v546
    %vm548 = vcmp.ge.f32.partialorder %v547, 1.0
    %v549 = vsel %vm548, 0.0, %v547
    %550 = vst [vmem:[#allocation2] sm:$0xff] %v549
    %s551 = scalar_lea.vmem [#allocation4], 24
    %v552 = vld [vmem:[%s551] sm:$0xff]
    %v553 = vmul.f32 %v552, 0.4
    %v554 = vsel %vm548, 0.6, 0.0
    %v555 = vadd.f32 %v553, %v554
    %s556 = scalar_lea.vmem [#allocation9], 24
    %557 = vst [vmem:[%s556] sm:$0xff] %v555
    %v558 = vpack.c.bf16 %v555, %v555
    %559 = vst [vmem:[#allocation3] sm:$0xf] %v558
    %v560 = vld [vmem:[#allocation3] sm:$0xf]
    %v561 = vld [vmem:[#allocation7] sm:$0xf]
    %v562 = vld [vmem:[#allocation7 + $0x4] sm:$0xf]
    %v563 = vld [vmem:[#allocation7 + $0x8] sm:$0xf]
    %v564 = vld [vmem:[#allocation7 + $0xc] sm:$0xf]
    %v565 = vld [vmem:[#allocation7 + $0x10] sm:$0xf]
    %v566 = vld [vmem:[#allocation7 + $0x14] sm:$0xf]
    %v567 = vld [vmem:[#allocation7 + $0x18] sm:$0xf]
    %v568 = vld [vmem:[#allocation7 + $0x1c] sm:$0xf]
    %v569 = vld [vmem:[#allocation7 + $0x20] sm:$0xf]
    %v570 = vld [vmem:[#allocation7 + $0x24] sm:$0xf]
    %v571 = vld [vmem:[#allocation7 + $0x28] sm:$0xf]
    %v572 = vld [vmem:[#allocation7 + $0x2c] sm:$0xf]
    %v573 = vld [vmem:[#allocation7 + $0x30] sm:$0xf]
    %v574 = vld [vmem:[#allocation7 + $0x34] sm:$0xf]
    %v575 = vld [vmem:[#allocation7 + $0x38] sm:$0xf]
    %v576 = vld [vmem:[#allocation7 + $0x3c] sm:$0xf]
    %v577 = vld [vmem:[%s2] sm:$0x1]
    %v579 = vlaneseq
    %v580 = vshrl.u32 %v579, 7
    %v581 = vsub.s32 0, %v580
    %v582 = vrot.slane %v577, %v581
    %v600 = vunpack.c.l.b16 %v561
    %v601 = vunpack.c.l.b16 %v562
    %v602 = vunpack.c.l.b16 %v563
    %v603 = vunpack.c.l.b16 %v564
    %v604 = vunpack.c.l.b16 %v565
    %v605 = vunpack.c.l.b16 %v566
    %v606 = vunpack.c.l.b16 %v567
    %v607 = vunpack.c.l.b16 %v568
    %v608 = vunpack.c.l.b16 %v569
    %v609 = vunpack.c.l.b16 %v570
    %v610 = vunpack.c.l.b16 %v571
    %v611 = vunpack.c.l.b16 %v572
    %v612 = vunpack.c.l.b16 %v573
    %v613 = vunpack.c.l.b16 %v574
    %v614 = vunpack.c.l.b16 %v575
    %v615 = vunpack.c.l.b16 %v576
    %v616 = vpack.c.b16 %v601, %v600
    %v617 = vpack.c.b16 %v603, %v602
    %v618 = vpack.c.b16 %v605, %v604
    %v619 = vpack.c.b16 %v607, %v606
    %v620 = vpack.c.b16 %v609, %v608
    %v621 = vpack.c.b16 %v611, %v610
    %v622 = vpack.c.b16 %v613, %v612
    %v623 = vpack.c.b16 %v615, %v614
    %632 = vmatprep.subr.bf16.mxu0 0
    %633 = vmatpush1.bf16.msra.mxu0 %v623
    %634 = vmatprep.subr.bf16.mxu0 0
    %635 = vmatpush1.bf16.msra.mxu0 %v622
    %636 = vmatprep.subr.bf16.mxu0 0
    %637 = vmatpush1.bf16.msra.mxu0 %v621
    %638 = vmatprep.subr.bf16.mxu0 0
    %639 = vmatpush1.bf16.msra.mxu0 %v620
    %640 = vmatprep.subr.bf16.mxu0 0
    %641 = vmatpush1.bf16.msra.mxu0 %v619
    %642 = vmatprep.subr.bf16.mxu0 0
    %643 = vmatpush1.bf16.msra.mxu0 %v618
    %644 = vmatprep.subr.bf16.mxu0 0
    %645 = vmatpush1.bf16.msra.mxu0 %v617
    %646 = vmatprep.subr.bf16.mxu0 0
    %647 = vmatpush1.bf16.msra.mxu0 %v616
    %648 = vmatprep.subr.bf16.mxu0 0
    %649 = vmatpush2.bf16.msra.mxu0 0
    %650 = vmatprep.subr.bf16.mxu0 0
    %651 = vmatpush2.bf16.msra.mxu0 0
    %652 = vmatprep.subr.bf16.mxu0 0
    %653 = vmatpush2.bf16.msra.mxu0 0
    %654 = vmatprep.subr.bf16.mxu0 0
    %655 = vmatpush2.bf16.msra.mxu0 0
    %656 = vmatprep.subr.bf16.mxu0 0
    %657 = vmatpush2.bf16.msra.mxu0 0
    %658 = vmatprep.subr.bf16.mxu0 0
    %659 = vmatpush2.bf16.msra.mxu0 0
    %660 = vmatprep.subr.bf16.mxu0 0
    %661 = vmatpush2.bf16.msra.mxu0 0
    %662 = vmatprep.subr.bf16.mxu0 0
    %663 = vmatpush2.bf16.msra.mxu0 0
    %664 = vmatprep.mubr.bf16.mxu0 0
    %665 = vmatmul.mubr.bf16.gmra.mxu0 %v560
    %v666 = vpop.f32.mrf.mxu0
    %v667 = vadd.f32 %v582, %v666
    %v668 = vpop.f32.mrf.mxu0
    %v669 = vpop.f32.mrf.mxu0
    %v670 = vpop.f32.mrf.mxu0
    %671 = vdwg.mxu0
    %v672 = vld [vmem:[#allocation2] sm:$0xff]
    %v673 = vmul.f32 %v672, 0.5
    %v674 = vmul.f32 %v667, 0.5
    %v675 = vadd.f32 %v673, %v674
    %vm676 = vcmp.ge.f32.partialorder %v675, 1.0
    %v677 = vsel %vm676, 0.0, %v675
    %678 = vst [vmem:[#allocation2] sm:$0xff] %v677
    %s679 = scalar_lea.vmem [#allocation4], 32
    %v680 = vld [vmem:[%s679] sm:$0xff]
    %v681 = vmul.f32 %v680, 0.4
    %v682 = vsel %vm676, 0.6, 0.0
    %v683 = vadd.f32 %v681, %v682
    %s684 = scalar_lea.vmem [#allocation9], 32
    %685 = vst [vmem:[%s684] sm:$0xff] %v683
    %v686 = vpack.c.bf16 %v683, %v683
    %687 = vst [vmem:[#allocation3] sm:$0xf] %v686
    %v688 = vld [vmem:[#allocation3] sm:$0xf]
    %v689 = vld [vmem:[#allocation7] sm:$0xf]
    %v690 = vld [vmem:[#allocation7 + $0x4] sm:$0xf]
    %v691 = vld [vmem:[#allocation7 + $0x8] sm:$0xf]
    %v692 = vld [vmem:[#allocation7 + $0xc] sm:$0xf]
    %v693 = vld [vmem:[#allocation7 + $0x10] sm:$0xf]
    %v694 = vld [vmem:[#allocation7 + $0x14] sm:$0xf]
    %v695 = vld [vmem:[#allocation7 + $0x18] sm:$0xf]
    %v696 = vld [vmem:[#allocation7 + $0x1c] sm:$0xf]
    %v697 = vld [vmem:[#allocation7 + $0x20] sm:$0xf]
    %v698 = vld [vmem:[#allocation7 + $0x24] sm:$0xf]
    %v699 = vld [vmem:[#allocation7 + $0x28] sm:$0xf]
    %v700 = vld [vmem:[#allocation7 + $0x2c] sm:$0xf]
    %v701 = vld [vmem:[#allocation7 + $0x30] sm:$0xf]
    %v702 = vld [vmem:[#allocation7 + $0x34] sm:$0xf]
    %v703 = vld [vmem:[#allocation7 + $0x38] sm:$0xf]
    %v704 = vld [vmem:[#allocation7 + $0x3c] sm:$0xf]
    %v705 = vld [vmem:[%s2] sm:$0x1]
    %v707 = vlaneseq
    %v708 = vshrl.u32 %v707, 7
    %v709 = vsub.s32 0, %v708
    %v710 = vrot.slane %v705, %v709
    %v728 = vunpack.c.l.b16 %v689
    %v729 = vunpack.c.l.b16 %v690
    %v730 = vunpack.c.l.b16 %v691
    %v731 = vunpack.c.l.b16 %v692
    %v732 = vunpack.c.l.b16 %v693
    %v733 = vunpack.c.l.b16 %v694
    %v734 = vunpack.c.l.b16 %v695
    %v735 = vunpack.c.l.b16 %v696
    %v736 = vunpack.c.l.b16 %v697
    %v737 = vunpack.c.l.b16 %v698
    %v738 = vunpack.c.l.b16 %v699
    %v739 = vunpack.c.l.b16 %v700
    %v740 = vunpack.c.l.b16 %v701
    %v741 = vunpack.c.l.b16 %v702
    %v742 = vunpack.c.l.b16 %v703
    %v743 = vunpack.c.l.b16 %v704
    %v744 = vpack.c.b16 %v729, %v728
    %v745 = vpack.c.b16 %v731, %v730
    %v746 = vpack.c.b16 %v733, %v732
    %v747 = vpack.c.b16 %v735, %v734
    %v748 = vpack.c.b16 %v737, %v736
    %v749 = vpack.c.b16 %v739, %v738
    %v750 = vpack.c.b16 %v741, %v740
    %v751 = vpack.c.b16 %v743, %v742
    %760 = vmatprep.subr.bf16.mxu0 0
    %761 = vmatpush1.bf16.msra.mxu0 %v751
    %762 = vmatprep.subr.bf16.mxu0 0
    %763 = vmatpush1.bf16.msra.mxu0 %v750
    %764 = vmatprep.subr.bf16.mxu0 0
    %765 = vmatpush1.bf16.msra.mxu0 %v749
    %766 = vmatprep.subr.bf16.mxu0 0
    %767 = vmatpush1.bf16.msra.mxu0 %v748
    %768 = vmatprep.subr.bf16.mxu0 0
    %769 = vmatpush1.bf16.msra.mxu0 %v747
    %770 = vmatprep.subr.bf16.mxu0 0
    %771 = vmatpush1.bf16.msra.mxu0 %v746
    %772 = vmatprep.subr.bf16.mxu0 0
    %773 = vmatpush1.bf16.msra.mxu0 %v745
    %774 = vmatprep.subr.bf16.mxu0 0
    %775 = vmatpush1.bf16.msra.mxu0 %v744
    %776 = vmatprep.subr.bf16.mxu0 0
    %777 = vmatpush2.bf16.msra.mxu0 0
    %778 = vmatprep.subr.bf16.mxu0 0
    %779 = vmatpush2.bf16.msra.mxu0 0
    %780 = vmatprep.subr.bf16.mxu0 0
    %781 = vmatpush2.bf16.msra.mxu0 0
    %782 = vmatprep.subr.bf16.mxu0 0
    %783 = vmatpush2.bf16.msra.mxu0 0
    %784 = vmatprep.subr.bf16.mxu0 0
    %785 = vmatpush2.bf16.msra.mxu0 0
    %786 = vmatprep.subr.bf16.mxu0 0
    %787 = vmatpush2.bf16.msra.mxu0 0
    %788 = vmatprep.subr.bf16.mxu0 0
    %789 = vmatpush2.bf16.msra.mxu0 0
    %790 = vmatprep.subr.bf16.mxu0 0
    %791 = vmatpush2.bf16.msra.mxu0 0
    %792 = vmatprep.mubr.bf16.mxu0 0
    %793 = vmatmul.mubr.bf16.gmra.mxu0 %v688
    %v794 = vpop.f32.mrf.mxu0
    %v795 = vadd.f32 %v710, %v794
    %v796 = vpop.f32.mrf.mxu0
    %v797 = vpop.f32.mrf.mxu0
    %v798 = vpop.f32.mrf.mxu0
    %799 = vdwg.mxu0
    %v800 = vld [vmem:[#allocation2] sm:$0xff]
    %v801 = vmul.f32 %v800, 0.5
    %v802 = vmul.f32 %v795, 0.5
    %v803 = vadd.f32 %v801, %v802
    %vm804 = vcmp.ge.f32.partialorder %v803, 1.0
    %v805 = vsel %vm804, 0.0, %v803
    %806 = vst [vmem:[#allocation2] sm:$0xff] %v805
    %s807 = scalar_lea.vmem [#allocation4], 40
    %v808 = vld [vmem:[%s807] sm:$0xff]
    %v809 = vmul.f32 %v808, 0.4
    %v810 = vsel %vm804, 0.6, 0.0
    %v811 = vadd.f32 %v809, %v810
    %s812 = scalar_lea.vmem [#allocation9], 40
    %813 = vst [vmem:[%s812] sm:$0xff] %v811
    %v814 = vpack.c.bf16 %v811, %v811
    %815 = vst [vmem:[#allocation3] sm:$0xf] %v814
    %v816 = vld [vmem:[#allocation3] sm:$0xf]
    %v817 = vld [vmem:[#allocation7] sm:$0xf]
    %v818 = vld [vmem:[#allocation7 + $0x4] sm:$0xf]
    %v819 = vld [vmem:[#allocation7 + $0x8] sm:$0xf]
    %v820 = vld [vmem:[#allocation7 + $0xc] sm:$0xf]
    %v821 = vld [vmem:[#allocation7 + $0x10] sm:$0xf]
    %v822 = vld [vmem:[#allocation7 + $0x14] sm:$0xf]
    %v823 = vld [vmem:[#allocation7 + $0x18] sm:$0xf]
    %v824 = vld [vmem:[#allocation7 + $0x1c] sm:$0xf]
    %v825 = vld [vmem:[#allocation7 + $0x20] sm:$0xf]
    %v826 = vld [vmem:[#allocation7 + $0x24] sm:$0xf]
    %v827 = vld [vmem:[#allocation7 + $0x28] sm:$0xf]
    %v828 = vld [vmem:[#allocation7 + $0x2c] sm:$0xf]
    %v829 = vld [vmem:[#allocation7 + $0x30] sm:$0xf]
    %v830 = vld [vmem:[#allocation7 + $0x34] sm:$0xf]
    %v831 = vld [vmem:[#allocation7 + $0x38] sm:$0xf]
    %v832 = vld [vmem:[#allocation7 + $0x3c] sm:$0xf]
    %v833 = vld [vmem:[%s2] sm:$0x1]
    %v835 = vlaneseq
    %v836 = vshrl.u32 %v835, 7
    %v837 = vsub.s32 0, %v836
    %v838 = vrot.slane %v833, %v837
    %v856 = vunpack.c.l.b16 %v817
    %v857 = vunpack.c.l.b16 %v818
    %v858 = vunpack.c.l.b16 %v819
    %v859 = vunpack.c.l.b16 %v820
    %v860 = vunpack.c.l.b16 %v821
    %v861 = vunpack.c.l.b16 %v822
    %v862 = vunpack.c.l.b16 %v823
    %v863 = vunpack.c.l.b16 %v824
    %v864 = vunpack.c.l.b16 %v825
    %v865 = vunpack.c.l.b16 %v826
    %v866 = vunpack.c.l.b16 %v827
    %v867 = vunpack.c.l.b16 %v828
    %v868 = vunpack.c.l.b16 %v829
    %v869 = vunpack.c.l.b16 %v830
    %v870 = vunpack.c.l.b16 %v831
    %v871 = vunpack.c.l.b16 %v832
    %v872 = vpack.c.b16 %v857, %v856
    %v873 = vpack.c.b16 %v859, %v858
    %v874 = vpack.c.b16 %v861, %v860
    %v875 = vpack.c.b16 %v863, %v862
    %v876 = vpack.c.b16 %v865, %v864
    %v877 = vpack.c.b16 %v867, %v866
    %v878 = vpack.c.b16 %v869, %v868
    %v879 = vpack.c.b16 %v871, %v870
    %888 = vmatprep.subr.bf16.mxu0 0
    %889 = vmatpush1.bf16.msra.mxu0 %v879
    %890 = vmatprep.subr.bf16.mxu0 0
    %891 = vmatpush1.bf16.msra.mxu0 %v878
    %892 = vmatprep.subr.bf16.mxu0 0
    %893 = vmatpush1.bf16.msra.mxu0 %v877
    %894 = vmatprep.subr.bf16.mxu0 0
    %895 = vmatpush1.bf16.msra.mxu0 %v876
    %896 = vmatprep.subr.bf16.mxu0 0
    %897 = vmatpush1.bf16.msra.mxu0 %v875
    %898 = vmatprep.subr.bf16.mxu0 0
    %899 = vmatpush1.bf16.msra.mxu0 %v874
    %900 = vmatprep.subr.bf16.mxu0 0
    %901 = vmatpush1.bf16.msra.mxu0 %v873
    %902 = vmatprep.subr.bf16.mxu0 0
    %903 = vmatpush1.bf16.msra.mxu0 %v872
    %904 = vmatprep.subr.bf16.mxu0 0
    %905 = vmatpush2.bf16.msra.mxu0 0
    %906 = vmatprep.subr.bf16.mxu0 0
    %907 = vmatpush2.bf16.msra.mxu0 0
    %908 = vmatprep.subr.bf16.mxu0 0
    %909 = vmatpush2.bf16.msra.mxu0 0
    %910 = vmatprep.subr.bf16.mxu0 0
    %911 = vmatpush2.bf16.msra.mxu0 0
    %912 = vmatprep.subr.bf16.mxu0 0
    %913 = vmatpush2.bf16.msra.mxu0 0
    %914 = vmatprep.subr.bf16.mxu0 0
    %915 = vmatpush2.bf16.msra.mxu0 0
    %916 = vmatprep.subr.bf16.mxu0 0
    %917 = vmatpush2.bf16.msra.mxu0 0
    %918 = vmatprep.subr.bf16.mxu0 0
    %919 = vmatpush2.bf16.msra.mxu0 0
    %920 = vmatprep.mubr.bf16.mxu0 0
    %921 = vmatmul.mubr.bf16.gmra.mxu0 %v816
    %v922 = vpop.f32.mrf.mxu0
    %v923 = vadd.f32 %v838, %v922
    %v924 = vpop.f32.mrf.mxu0
    %v925 = vpop.f32.mrf.mxu0
    %v926 = vpop.f32.mrf.mxu0
    %927 = vdwg.mxu0
    %v928 = vld [vmem:[#allocation2] sm:$0xff]
    %v929 = vmul.f32 %v928, 0.5
    %v930 = vmul.f32 %v923, 0.5
    %v931 = vadd.f32 %v929, %v930
    %vm932 = vcmp.ge.f32.partialorder %v931, 1.0
    %v933 = vsel %vm932, 0.0, %v931
    %934 = vst [vmem:[#allocation2] sm:$0xff] %v933
    %s935 = scalar_lea.vmem [#allocation4], 48
    %v936 = vld [vmem:[%s935] sm:$0xff]
    %v937 = vmul.f32 %v936, 0.4
    %v938 = vsel %vm932, 0.6, 0.0
    %v939 = vadd.f32 %v937, %v938
    %s940 = scalar_lea.vmem [#allocation9], 48
    %941 = vst [vmem:[%s940] sm:$0xff] %v939
    %v942 = vpack.c.bf16 %v939, %v939
    %943 = vst [vmem:[#allocation3] sm:$0xf] %v942
    %v944 = vld [vmem:[#allocation3] sm:$0xf]
    %v945 = vld [vmem:[#allocation7] sm:$0xf]
    %v946 = vld [vmem:[#allocation7 + $0x4] sm:$0xf]
    %v947 = vld [vmem:[#allocation7 + $0x8] sm:$0xf]
    %v948 = vld [vmem:[#allocation7 + $0xc] sm:$0xf]
    %v949 = vld [vmem:[#allocation7 + $0x10] sm:$0xf]
    %v950 = vld [vmem:[#allocation7 + $0x14] sm:$0xf]
    %v951 = vld [vmem:[#allocation7 + $0x18] sm:$0xf]
    %v952 = vld [vmem:[#allocation7 + $0x1c] sm:$0xf]
    %v953 = vld [vmem:[#allocation7 + $0x20] sm:$0xf]
    %v954 = vld [vmem:[#allocation7 + $0x24] sm:$0xf]
    %v955 = vld [vmem:[#allocation7 + $0x28] sm:$0xf]
    %v956 = vld [vmem:[#allocation7 + $0x2c] sm:$0xf]
    %v957 = vld [vmem:[#allocation7 + $0x30] sm:$0xf]
    %v958 = vld [vmem:[#allocation7 + $0x34] sm:$0xf]
    %v959 = vld [vmem:[#allocation7 + $0x38] sm:$0xf]
    %v960 = vld [vmem:[#allocation7 + $0x3c] sm:$0xf]
    %v961 = vld [vmem:[%s2] sm:$0x1]
    %v963 = vlaneseq
    %v964 = vshrl.u32 %v963, 7
    %v965 = vsub.s32 0, %v964
    %v966 = vrot.slane %v961, %v965
    %v984 = vunpack.c.l.b16 %v945
    %v985 = vunpack.c.l.b16 %v946
    %v986 = vunpack.c.l.b16 %v947
    %v987 = vunpack.c.l.b16 %v948
    %v988 = vunpack.c.l.b16 %v949
    %v989 = vunpack.c.l.b16 %v950
    %v990 = vunpack.c.l.b16 %v951
    %v991 = vunpack.c.l.b16 %v952
    %v992 = vunpack.c.l.b16 %v953
    %v993 = vunpack.c.l.b16 %v954
    %v994 = vunpack.c.l.b16 %v955
    %v995 = vunpack.c.l.b16 %v956
    %v996 = vunpack.c.l.b16 %v957
    %v997 = vunpack.c.l.b16 %v958
    %v998 = vunpack.c.l.b16 %v959
    %v999 = vunpack.c.l.b16 %v960
    %v1000 = vpack.c.b16 %v985, %v984
    %v1001 = vpack.c.b16 %v987, %v986
    %v1002 = vpack.c.b16 %v989, %v988
    %v1003 = vpack.c.b16 %v991, %v990
    %v1004 = vpack.c.b16 %v993, %v992
    %v1005 = vpack.c.b16 %v995, %v994
    %v1006 = vpack.c.b16 %v997, %v996
    %v1007 = vpack.c.b16 %v999, %v998
    %1016 = vmatprep.subr.bf16.mxu0 0
    %1017 = vmatpush1.bf16.msra.mxu0 %v1007
    %1018 = vmatprep.subr.bf16.mxu0 0
    %1019 = vmatpush1.bf16.msra.mxu0 %v1006
    %1020 = vmatprep.subr.bf16.mxu0 0
    %1021 = vmatpush1.bf16.msra.mxu0 %v1005
    %1022 = vmatprep.subr.bf16.mxu0 0
    %1023 = vmatpush1.bf16.msra.mxu0 %v1004
    %1024 = vmatprep.subr.bf16.mxu0 0
    %1025 = vmatpush1.bf16.msra.mxu0 %v1003
    %1026 = vmatprep.subr.bf16.mxu0 0
    %1027 = vmatpush1.bf16.msra.mxu0 %v1002
    %1028 = vmatprep.subr.bf16.mxu0 0
    %1029 = vmatpush1.bf16.msra.mxu0 %v1001
    %1030 = vmatprep.subr.bf16.mxu0 0
    %1031 = vmatpush1.bf16.msra.mxu0 %v1000
    %1032 = vmatprep.subr.bf16.mxu0 0
    %1033 = vmatpush2.bf16.msra.mxu0 0
    %1034 = vmatprep.subr.bf16.mxu0 0
    %1035 = vmatpush2.bf16.msra.mxu0 0
    %1036 = vmatprep.subr.bf16.mxu0 0
    %1037 = vmatpush2.bf16.msra.mxu0 0
    %1038 = vmatprep.subr.bf16.mxu0 0
    %1039 = vmatpush2.bf16.msra.mxu0 0
    %1040 = vmatprep.subr.bf16.mxu0 0
    %1041 = vmatpush2.bf16.msra.mxu0 0
    %1042 = vmatprep.subr.bf16.mxu0 0
    %1043 = vmatpush2.bf16.msra.mxu0 0
    %1044 = vmatprep.subr.bf16.mxu0 0
    %1045 = vmatpush2.bf16.msra.mxu0 0
    %1046 = vmatprep.subr.bf16.mxu0 0
    %1047 = vmatpush2.bf16.msra.mxu0 0
    %1048 = vmatprep.mubr.bf16.mxu0 0
    %1049 = vmatmul.mubr.bf16.gmra.mxu0 %v944
    %v1050 = vpop.f32.mrf.mxu0
    %v1051 = vadd.f32 %v966, %v1050
    %v1052 = vpop.f32.mrf.mxu0
    %v1053 = vpop.f32.mrf.mxu0
    %v1054 = vpop.f32.mrf.mxu0
    %1055 = vdwg.mxu0
    %v1056 = vld [vmem:[#allocation2] sm:$0xff]
    %v1057 = vmul.f32 %v1056, 0.5
    %v1058 = vmul.f32 %v1051, 0.5
    %v1059 = vadd.f32 %v1057, %v1058
    %vm1060 = vcmp.ge.f32.partialorder %v1059, 1.0
    %v1061 = vsel %vm1060, 0.0, %v1059
    %1062 = vst [vmem:[#allocation2] sm:$0xff] %v1061
    %s1063 = scalar_lea.vmem [#allocation4], 56
    %v1064 = vld [vmem:[%s1063] sm:$0xff]
    %v1065 = vmul.f32 %v1064, 0.4
    %v1066 = vsel %vm1060, 0.6, 0.0
    %v1067 = vadd.f32 %v1065, %v1066
    %s1068 = scalar_lea.vmem [#allocation9], 56
    %1069 = vst [vmem:[%s1068] sm:$0xff] %v1067
    %v1070 = vpack.c.bf16 %v1067, %v1067
    %1071 = vst [vmem:[#allocation3] sm:$0xf] %v1070
    // Predicated region
    $region26: #{tpu_custom_call.1} parent=1 // pred_check
      _
    $region27: #{tpu_custom_call.1} parent=1 // pred_check_branch
      %1073 = sbr.rel (0) target = $region29
    $region28: #{tpu_custom_call.1} parent=1 // pred_region
      %s1075 = ssub.s32 1024, 1024
      %1076 = vsyncadd [#allocation6], %s1075
      %s1077 = sshll.u32 [#allocation9], 4
      %s1078 = int_to_ptr.vmem [resolvable:$true] %s1077
      %1083 = dma.vmem_to_hbm [thread:$0]  %s1078, 1024, %s3, [#allocation6], 128, 128, 8
    $region29: #{tpu_custom_call.1} parent=1 // pred_fallthru
      _
    // Predicated region
    $region30: #{tpu_custom_call.1} parent=1 // pred_check
      _
    $region31: #{tpu_custom_call.1} parent=1 // pred_check_branch
      %1085 = sbr.rel (0) target = $region33
    $region32: #{tpu_custom_call.1} parent=1 // pred_region
      %1086 = dma.done [#allocation6], 1024
    $region33: #{tpu_custom_call.1} parent=1 // pred_fallthru
      _
    %1087 = vsyncpa [#allocation5], 1
    %1088 = vsyncpa [#allocation8], 1
    %1089 = vsyncpa [#allocation6], 1

</llo_original>
